<compile_context>
chip_gen: v7x
topology: tpu7x:2x2x1
jax: 0.10.0
libtpu: 0.0.40
codegen_flags: <defaults>
</compile_context>

<pallas_src>
import math

import jax
import jax.numpy as jnp
from jax.experimental import pallas as pl
from jax.experimental.pallas import tpu as pltpu


def _round_up(x, m):
    return ((x + m - 1) // m) * m


def _pick_vmem_limit_bytes():
    """Generation-aware VMEM limit: ~3/4 of physical, capped at 100 MiB."""
    phys = 64 * 1024 * 1024  # conservative fallback (v7x per-TC VMEM)
    try:
        phys = int(pltpu.get_tpu_info().vmem_capacity_bytes)
    except Exception:
        pass
    return min((phys * 3) // 4, 100 * 1024 * 1024)


def multi_head_attention(queries, keys, values,
                         w_query, w_key, w_value, w_output,
                         *, num_heads, dim_keys, dim_values,
                         q_tile=256, kv_tile=256,
                         compute_dtype=jnp.bfloat16,
                         out_dtype=jnp.float32):
    """queries: (B, Q, Dm); keys/values: (B, KV, Dm).

    w_query/w_key: (H, Dm, dk); w_value: (H, Dm, dv); w_output: (H*dv, Dm).
    Returns: (B, Q, Dm) in `out_dtype`.
    """
    B, Q, Dm = queries.shape
    KV = keys.shape[1]
    H, dk, dv = num_heads, dim_keys, dim_values

    # Tile sizes (second-minor block dims must be multiples of 8; keep the KV
    # tile a multiple of 128 so the score lane dim stays dense).
    tq = _round_up(min(q_tile, Q), 8)
    tk = _round_up(min(kv_tile, KV), 128)
    q_pad = _round_up(Q, tq)
    kv_pad = _round_up(KV, tk)
    kv_is_padded = kv_pad != KV

    scale = 1.0 / math.sqrt(dk)

    # --- fused, lane-dense bf16 projections (XLA), hoisted out of the kernel.
    wq_f = jnp.transpose(w_query, (1, 0, 2)).reshape(Dm, H * dk).astype(compute_dtype)
    wk_f = jnp.transpose(w_key, (1, 0, 2)).reshape(Dm, H * dk).astype(compute_dtype)
    wv_f = jnp.transpose(w_value, (1, 0, 2)).reshape(Dm, H * dv).astype(compute_dtype)

    q_c = queries.astype(compute_dtype)
    k_c = keys.astype(compute_dtype)
    v_c = values.astype(compute_dtype)

    # bf16 operands, f32 MXU accumulation; 1/sqrt(dk) folded into the query
    # projection epilogue.  Cast to bf16 BEFORE the reshape/transpose passes.
    qp = (jnp.einsum("bsd,dn->bsn", q_c, wq_f,
                     preferred_element_type=jnp.float32) * scale).astype(compute_dtype)
    kp = jnp.einsum("bsd,dn->bsn", k_c, wk_f,
                    preferred_element_type=jnp.float32).astype(compute_dtype)
    vp = jnp.einsum("bsd,dn->bsn", v_c, wv_f,
                    preferred_element_type=jnp.float32).astype(compute_dtype)

    qp = qp.reshape(B, Q, H, dk).transpose(0, 2, 1, 3)   # (B, H, Q,  dk)
    kp = kp.reshape(B, KV, H, dk).transpose(0, 2, 1, 3)  # (B, H, KV, dk)  (no dk/KV swap)
    vp = vp.reshape(B, KV, H, dv).transpose(0, 2, 1, 3)  # (B, H, KV, dv)

    # Pad ragged Q / KV to the tile size (padded KV columns masked in-kernel,
    # padded Q rows sliced off after the call).
    if q_pad != Q:
        qp = jnp.pad(qp, ((0, 0), (0, 0), (0, q_pad - Q), (0, 0)))
    if kv_is_padded:
        kp = jnp.pad(kp, ((0, 0), (0, 0), (0, kv_pad - KV), (0, 0)))
        vp = jnp.pad(vp, ((0, 0), (0, 0), (0, kv_pad - KV), (0, 0)))

    # Output projection reshaped so concat index h*dv+v becomes (H, dv, Dm).
    wo_r = w_output.reshape(H, dv, Dm).astype(compute_dtype)

    grid = (B, q_pad // tq, kv_pad // tk)

    def kernel(q_ref, k_ref, v_ref, wo_ref, o_ref, m_sc, l_sc, acc_sc):
        ki = pl.program_id(2)

        @pl.when(ki == 0)
        def _init():
            m_sc[...] = jnp.full_like(m_sc, -jnp.inf)
            l_sc[...] = jnp.zeros_like(l_sc)
            acc_sc[...] = jnp.zeros_like(acc_sc)

        q = q_ref[0]   # (H, tq, dk) bf16, pre-scaled
        k = k_ref[0]   # (H, tk, dk) bf16
        v = v_ref[0]   # (H, tk, dv) bf16

        # (H, tq, tk) scores: MXU-native NT contraction, f32 accumulation.
        s = jnp.einsum("hqd,hkd->hqk", q, k,
                       preferred_element_type=jnp.float32)

        if kv_is_padded:  # static: only emitted when the KV tail is padded
            col = jax.lax.broadcasted_iota(jnp.int32, (1, tq, tk), 2)
            valid = (ki * tk + col) < KV
            s = jnp.where(valid, s, -1e30)

        # Online softmax update (all f32 — v5e-safe; no bf16 EUP assumption).
        m_prev = m_sc[...]
        m_new = jnp.maximum(m_prev, jnp.max(s, axis=-1, keepdims=True))
        alpha = jnp.exp(m_prev - m_new)
        p = jnp.exp(s - m_new)                         # (H, tq, tk) f32
        l_sc[...] = alpha * l_sc[...] + jnp.sum(p, axis=-1, keepdims=True)
        acc_sc[...] = alpha * acc_sc[...] + jnp.einsum(
            "hqk,hkv->hqv", p.astype(v.dtype), v,
            preferred_element_type=jnp.float32)
        m_sc[...] = m_new

        @pl.when(ki == pl.num_programs(2) - 1)
        def _finalize():
            # 1/l on the EUP (approx vrcp) — otherwise-idle bundle slot.
            inv_l = pl.reciprocal(l_sc[...], approx=True)
            av = (acc_sc[...] * inv_l).astype(wo_ref.dtype)   # (H, tq, dv) bf16
            # Heads-concat + output projection fused: sum_h av_h @ Wo_h,
            # unrolled over the (static, small) head count; f32 accumulation.
            out = jnp.dot(av[0], wo_ref[0], preferred_element_type=jnp.float32)
            for h in range(1, H):
                out = out + jnp.dot(av[h], wo_ref[h],
                                    preferred_element_type=jnp.float32)
            o_ref[0] = out.astype(o_ref.dtype)               # lane-dense (tq, Dm)

    grid_spec = pltpu.PrefetchScalarGridSpec(
        num_scalar_prefetch=0,
        grid=grid,
        in_specs=[
            pl.BlockSpec((1, H, tq, dk), lambda b, qi, ki: (b, 0, qi, 0)),  # q
            pl.BlockSpec((1, H, tk, dk), lambda b, qi, ki: (b, 0, ki, 0)),  # k
            pl.BlockSpec((1, H, tk, dv), lambda b, qi, ki: (b, 0, ki, 0)),  # v
            pl.BlockSpec((H, dv, Dm),    lambda b, qi, ki: (0, 0, 0)),      # Wo
        ],
        out_specs=pl.BlockSpec((1, tq, Dm), lambda b, qi, ki: (b, qi, 0)),
        scratch_shapes=[
            pltpu.VMEM((H, tq, 1), jnp.float32),    # running max m
            pltpu.VMEM((H, tq, 1), jnp.float32),    # running denom l
            pltpu.VMEM((H, tq, dv), jnp.float32),   # running accumulator
        ],
    )

    out = pl.pallas_call(
        kernel,
        out_shape=jax.ShapeDtypeStruct((B, q_pad, Dm), out_dtype),
        grid_spec=grid_spec,
        compiler_params=pltpu.CompilerParams(
            dimension_semantics=("parallel", "parallel", "arbitrary"),
            vmem_limit_bytes=_pick_vmem_limit_bytes(),
        ),
    )(qp, kp, vp, wo_r)

    if q_pad != Q:
        out = out[:, :Q, :]
    return out


def _xavier_normal(key, shape):
    # torch.nn.init.xavier_normal_ scale: for a 3D (H, Dm, d) tensor
    # fan_in = Dm*d, fan_out = H*d; for 2D (rows, cols) fan_out = rows,
    # fan_in = cols.  Exact parity with torch RNG is not required.
    if len(shape) == 3:
        h, dm, d = shape
        fan_in, fan_out = dm * d, h * d
    else:
        fan_out, fan_in = shape[0], shape[1]
    std = math.sqrt(2.0 / (fan_in + fan_out))
    return std * jax.random.normal(key, shape, dtype=jnp.float32)


def _reference(queries, keys, values, wq, wk, wv, wo, dk):
    # Plain-JAX f32 reference mirroring the PyTorch forward (no mask,
    # eval-mode dropout).
    qp = jnp.einsum("bqd,hdk->bhqk", queries, wq)
    kp = jnp.einsum("bmd,hdk->bhmk", keys, wk)
    vp = jnp.einsum("bmd,hdv->bhmv", values, wv)
    attn = jax.nn.softmax(
        jnp.einsum("bhqk,bhmk->bhqm", qp, kp) / math.sqrt(dk), axis=-1)
    av = jnp.einsum("bhqm,bhmv->bhqv", attn, vp)
    B, H, Q, dv = av.shape
    cat = jnp.transpose(av, (0, 2, 1, 3)).reshape(B, Q, H * dv)
    return cat @ wo


if __name__ == "__main__":
    B, Dm = 2, 32
    H, dk, dv = 4, 16, 16

    k_wq, k_wk, k_wv, k_wo, k_c1, k_c2, k_c3 = jax.random.split(
        jax.random.PRNGKey(0), 7)

    w_query = _xavier_normal(k_wq, (H, Dm, dk))
    w_key = _xavier_normal(k_wk, (H, Dm, dk))
    w_value = _xavier_normal(k_wv, (H, Dm, dv))
    w_output = _xavier_normal(k_wo, (H * dv, Dm))

    def run_case(q_len, kv_len, q_tile, kv_tile, key):
        k1, k2, k3 = jax.random.split(key, 3)
        queries = jax.random.normal(k1, (B, q_len, Dm), dtype=jnp.float32)
        keys = jax.random.normal(k2, (B, kv_len, Dm), dtype=jnp.float32)
        values = jax.random.normal(k3, (B, kv_len, Dm), dtype=jnp.float32)

        out = multi_head_attention(
            queries, keys, values, w_query, w_key, w_value, w_output,
            num_heads=H, dim_keys=dk, dim_values=dv,
            q_tile=q_tile, kv_tile=kv_tile)
        out = jax.block_until_ready(out)

        ref = _reference(queries, keys, values, w_query, w_key, w_value,
                         w_output, dk)
        assert out.shape == (B, q_len, Dm), out.shape
        # bf16 MXU inputs + approx reciprocal -> compare against the f32
        # reference with a correspondingly relaxed tolerance.
        assert jnp.allclose(out, ref, atol=2e-2, rtol=2e-2), (
            f"mismatch (q={q_len}, kv={kv_len}): max abs diff = "
            f"{float(jnp.max(jnp.abs(out - ref)))}")

    # Multi-tile case: 2 Q tiles x 2 KV steps (no padding) exercises the
    # online-softmax init / accumulate / finalize path and the "arbitrary"
    # KV grid axis.
    run_case(q_len=16, kv_len=256, q_tile=8, kv_tile=128, key=k_c1)
    # Tiny case: KV padded 8 -> 128 exercises the in-kernel padding mask.
    run_case(q_len=8, kv_len=8, q_tile=256, kv_tile=256, key=k_c2)
    # Ragged case: Q padded 10 -> 16 (output slice) and KV padded 200 -> 256
    # (partially-masked last KV tile).
    run_case(q_len=10, kv_len=200, q_tile=8, kv_tile=128, key=k_c3)

    print("KERNEL_OK")
</pallas_src>

<mosaic_0001>
module attributes {stable_mosaic.version = 11 : i64} {
  func.func @kernel(%arg0: i32, %arg1: i32, %arg2: i32, %arg3: memref<1x4x8x16xbf16, #tpu.memory_space<vmem>>, %arg4: memref<1x4x128x16xbf16, #tpu.memory_space<vmem>>, %arg5: memref<1x4x128x16xbf16, #tpu.memory_space<vmem>>, %arg6: memref<4x16x32xbf16, #tpu.memory_space<vmem>>, %arg7: memref<1x8x32xf32, #tpu.memory_space<vmem>>, %arg8: memref<4x8x1xf32, #tpu.memory_space<vmem>>, %arg9: memref<4x8x1xf32, #tpu.memory_space<vmem>>, %arg10: memref<4x8x16xf32, #tpu.memory_space<vmem>>) attributes {dimension_semantics = [#tpu.dimension_semantics<parallel>, #tpu.dimension_semantics<parallel>, #tpu.dimension_semantics<arbitrary>], iteration_bounds = array<i64: 2, 2, 2>, scalar_prefetch = 0 : i64, scratch_operands = 3 : i64, tpu.core_type = #tpu.core_type<tc>, window_params = [{transform_indices = @transform_0, window_bounds = array<i64: 1, 4, 8, 16>}, {transform_indices = @transform_1, window_bounds = array<i64: 1, 4, 128, 16>}, {transform_indices = @transform_2, window_bounds = array<i64: 1, 4, 128, 16>}, {pipeline_mode = #tpu.pipeline_mode<synchronous>, transform_indices = @transform_3, window_bounds = array<i64: 4, 16, 32>}, {transform_indices = @transform_4, window_bounds = array<i64: 1, 8, 32>}]} {
    %c0_i32 = arith.constant 0 : i32
    %0 = arith.cmpi eq, %arg2, %c0_i32 : i32
    %1 = arith.extui %0 : i1 to i32
    %c0_i32_0 = arith.constant 0 : i32
    %2 = arith.cmpi ne, %1, %c0_i32_0 : i32
    scf.if %2 {
      %cst_34 = arith.constant 0xFF800000 : f32
      %36 = vector.broadcast %cst_34 : f32 to vector<4x8x1xf32>
      %c0_35 = arith.constant 0 : index
      %c0_36 = arith.constant 0 : index
      %c0_37 = arith.constant 0 : index
      %37 = vector.load %arg8[%c0_35, %c0_36, %c0_37] : memref<4x8x1xf32, #tpu.memory_space<vmem>>, vector<4x8x1xf32>
      tpu.vector_store %arg8[%c0_35, %c0_36, %c0_37], %36 {strides = array<i32>} : memref<4x8x1xf32, #tpu.memory_space<vmem>>, vector<4x8x1xf32>,
      %cst_38 = arith.constant 0.000000e+00 : f32
      %38 = vector.broadcast %cst_38 : f32 to vector<4x8x1xf32>
      %c0_39 = arith.constant 0 : index
      %c0_40 = arith.constant 0 : index
      %c0_41 = arith.constant 0 : index
      %39 = vector.load %arg9[%c0_39, %c0_40, %c0_41] : memref<4x8x1xf32, #tpu.memory_space<vmem>>, vector<4x8x1xf32>
      tpu.vector_store %arg9[%c0_39, %c0_40, %c0_41], %38 {strides = array<i32>} : memref<4x8x1xf32, #tpu.memory_space<vmem>>, vector<4x8x1xf32>,
      %cst_42 = arith.constant 0.000000e+00 : f32
      %40 = vector.broadcast %cst_42 : f32 to vector<4x8x16xf32>
      %c0_43 = arith.constant 0 : index
      %c0_44 = arith.constant 0 : index
      %c0_45 = arith.constant 0 : index
      %41 = vector.load %arg10[%c0_43, %c0_44, %c0_45] : memref<4x8x16xf32, #tpu.memory_space<vmem>>, vector<4x8x16xf32>
      tpu.vector_store %arg10[%c0_43, %c0_44, %c0_45], %40 {strides = array<i32>} : memref<4x8x16xf32, #tpu.memory_space<vmem>>, vector<4x8x16xf32>,
    } else {
    }
    %c0 = arith.constant 0 : index
    %c0_1 = arith.constant 0 : index
    %c0_2 = arith.constant 0 : index
    %c0_3 = arith.constant 0 : index
    %3 = vector.load %arg3[%c0, %c0_1, %c0_2, %c0_3] : memref<1x4x8x16xbf16, #tpu.memory_space<vmem>>, vector<1x4x8x16xbf16>
    %4 = vector.shape_cast %3 : vector<1x4x8x16xbf16> to vector<4x8x16xbf16>
    %c0_4 = arith.constant 0 : index
    %c0_5 = arith.constant 0 : index
    %c0_6 = arith.constant 0 : index
    %c0_7 = arith.constant 0 : index
    %5 = vector.load %arg4[%c0_4, %c0_5, %c0_6, %c0_7] : memref<1x4x128x16xbf16, #tpu.memory_space<vmem>>, vector<1x4x128x16xbf16>
    %6 = vector.shape_cast %5 : vector<1x4x128x16xbf16> to vector<4x128x16xbf16>
    %c0_8 = arith.constant 0 : index
    %c0_9 = arith.constant 0 : index
    %c0_10 = arith.constant 0 : index
    %c0_11 = arith.constant 0 : index
    %7 = vector.load %arg5[%c0_8, %c0_9, %c0_10, %c0_11] : memref<1x4x128x16xbf16, #tpu.memory_space<vmem>>, vector<1x4x128x16xbf16>
    %8 = vector.shape_cast %7 : vector<1x4x128x16xbf16> to vector<4x128x16xbf16>
    "tpu.trace_start"() <{level = 10 : i32, message = "hqd,hkd->hqk"}> : () -> ()
    %cst = arith.constant dense<0.000000e+00> : vector<4x8x128xf32>
    %9 = tpu.matmul %4, %6, %cst {dimension_numbers = #tpu.dot_dimension_numbers<[2], [2], [1], [1], [0, 0, 0, 1, 1, 1], [0], [0]>} : vector<4x8x16xbf16>, vector<4x128x16xbf16>, vector<4x8x128xf32> -> vector<4x8x128xf32>
    "tpu.trace_stop"() : () -> ()
    %c0_12 = arith.constant 0 : index
    %c0_13 = arith.constant 0 : index
    %c0_14 = arith.constant 0 : index
    %10 = vector.load %arg8[%c0_12, %c0_13, %c0_14] : memref<4x8x1xf32, #tpu.memory_space<vmem>>, vector<4x8x1xf32>
    %cst_15 = arith.constant dense<0xFF800000> : vector<4x8xf32>
    %11 = vector.multi_reduction <maximumf>, %9, %cst_15 [2] : vector<4x8x128xf32> to vector<4x8xf32>
    %12 = vector.shape_cast %11 : vector<4x8xf32> to vector<4x8x1xf32>
    %13 = arith.maximumf %10, %12 : vector<4x8x1xf32>
    %14 = arith.subf %10, %13 : vector<4x8x1xf32>
    %15 = math.exp %14 : vector<4x8x1xf32>
    %16 = vector.broadcast %13 : vector<4x8x1xf32> to vector<4x8x128xf32>
    %17 = arith.subf %9, %16 : vector<4x8x128xf32>
    %18 = math.exp %17 : vector<4x8x128xf32>
    %c0_16 = arith.constant 0 : index
    %c0_17 = arith.constant 0 : index
    %c0_18 = arith.constant 0 : index
    %19 = vector.load %arg9[%c0_16, %c0_17, %c0_18] : memref<4x8x1xf32, #tpu.memory_space<vmem>>, vector<4x8x1xf32>
    %20 = arith.mulf %15, %19 : vector<4x8x1xf32>
    %cst_19 = arith.constant dense<0.000000e+00> : vector<4x8xf32>
    %21 = vector.multi_reduction <add>, %18, %cst_19 [2] : vector<4x8x128xf32> to vector<4x8xf32>
    %22 = vector.shape_cast %21 : vector<4x8xf32> to vector<4x8x1xf32>
    %23 = arith.addf %20, %22 : vector<4x8x1xf32>
    %c0_20 = arith.constant 0 : index
    %c0_21 = arith.constant 0 : index
    %c0_22 = arith.constant 0 : index
    %24 = vector.load %arg9[%c0_20, %c0_21, %c0_22] : memref<4x8x1xf32, #tpu.memory_space<vmem>>, vector<4x8x1xf32>
    tpu.vector_store %arg9[%c0_20, %c0_21, %c0_22], %23 {strides = array<i32>} : memref<4x8x1xf32, #tpu.memory_space<vmem>>, vector<4x8x1xf32>,
    %c0_23 = arith.constant 0 : index
    %c0_24 = arith.constant 0 : index
    %c0_25 = arith.constant 0 : index
    %25 = vector.load %arg10[%c0_23, %c0_24, %c0_25] : memref<4x8x16xf32, #tpu.memory_space<vmem>>, vector<4x8x16xf32>
    %26 = vector.broadcast %15 : vector<4x8x1xf32> to vector<4x8x16xf32>
    %27 = arith.mulf %26, %25 : vector<4x8x16xf32>
    %28 = arith.truncf %18 : vector<4x8x128xf32> to vector<4x8x128xbf16>
    "tpu.trace_start"() <{level = 10 : i32, message = "hqk,hkv->hqv"}> : () -> ()
    %cst_26 = arith.constant dense<0.000000e+00> : vector<4x8x16xf32>
    %29 = tpu.matmul %28, %8, %cst_26 {dimension_numbers = #tpu.dot_dimension_numbers<[2], [1], [1], [2], [0, 0, 0, 1, 1, 2], [0], [0]>} : vector<4x8x128xbf16>, vector<4x128x16xbf16>, vector<4x8x16xf32> -> vector<4x8x16xf32>
    "tpu.trace_stop"() : () -> ()
    %30 = arith.addf %27, %29 : vector<4x8x16xf32>
    %c0_27 = arith.constant 0 : index
    %c0_28 = arith.constant 0 : index
    %c0_29 = arith.constant 0 : index
    %31 = vector.load %arg10[%c0_27, %c0_28, %c0_29] : memref<4x8x16xf32, #tpu.memory_space<vmem>>, vector<4x8x16xf32>
    tpu.vector_store %arg10[%c0_27, %c0_28, %c0_29], %30 {strides = array<i32>} : memref<4x8x16xf32, #tpu.memory_space<vmem>>, vector<4x8x16xf32>,
    %c0_30 = arith.constant 0 : index
    %c0_31 = arith.constant 0 : index
    %c0_32 = arith.constant 0 : index
    %32 = vector.load %arg8[%c0_30, %c0_31, %c0_32] : memref<4x8x1xf32, #tpu.memory_space<vmem>>, vector<4x8x1xf32>
    tpu.vector_store %arg8[%c0_30, %c0_31, %c0_32], %13 {strides = array<i32>} : memref<4x8x1xf32, #tpu.memory_space<vmem>>, vector<4x8x1xf32>,
    %c1_i32 = arith.constant 1 : i32
    %33 = arith.cmpi eq, %arg2, %c1_i32 : i32
    %34 = arith.extui %33 : i1 to i32
    %c0_i32_33 = arith.constant 0 : i32
    %35 = arith.cmpi ne, %34, %c0_i32_33 : i32
    scf.if %35 {
      %c0_34 = arith.constant 0 : index
      %c0_35 = arith.constant 0 : index
      %c0_36 = arith.constant 0 : index
      %36 = vector.load %arg9[%c0_34, %c0_35, %c0_36] : memref<4x8x1xf32, #tpu.memory_space<vmem>>, vector<4x8x1xf32>
      %37 = tpu.reciprocal %36 {approx = true} : vector<4x8x1xf32> -> vector<4x8x1xf32>
      %c0_37 = arith.constant 0 : index
      %c0_38 = arith.constant 0 : index
      %c0_39 = arith.constant 0 : index
      %38 = vector.load %arg10[%c0_37, %c0_38, %c0_39] : memref<4x8x16xf32, #tpu.memory_space<vmem>>, vector<4x8x16xf32>
      %39 = vector.broadcast %37 : vector<4x8x1xf32> to vector<4x8x16xf32>
      %40 = arith.mulf %38, %39 : vector<4x8x16xf32>
      %41 = arith.truncf %40 : vector<4x8x16xf32> to vector<4x8x16xbf16>
      %42 = vector.extract_strided_slice %41 {offsets = [0, 0, 0], sizes = [1, 8, 16], strides = [1, 1, 1]} : vector<4x8x16xbf16> to vector<1x8x16xbf16>
      %43 = vector.shape_cast %42 : vector<1x8x16xbf16> to vector<8x16xbf16>
      %c0_40 = arith.constant 0 : index
      %c0_41 = arith.constant 0 : index
      %c0_42 = arith.constant 0 : index
      %44 = vector.load %arg6[%c0_40, %c0_41, %c0_42] : memref<4x16x32xbf16, #tpu.memory_space<vmem>>, vector<1x16x32xbf16>
      %45 = vector.shape_cast %44 : vector<1x16x32xbf16> to vector<16x32xbf16>
      %cst_43 = arith.constant dense<0.000000e+00> : vector<8x32xf32>
      %46 = tpu.matmul %43, %45, %cst_43 {dimension_numbers = #tpu.dot_dimension_numbers<[1], [0], [0], [1], [0, 0, 1, 1], [], []>} : vector<8x16xbf16>, vector<16x32xbf16>, vector<8x32xf32> -> vector<8x32xf32>
      %47 = vector.extract_strided_slice %41 {offsets = [1, 0, 0], sizes = [1, 8, 16], strides = [1, 1, 1]} : vector<4x8x16xbf16> to vector<1x8x16xbf16>
      %48 = vector.shape_cast %47 : vector<1x8x16xbf16> to vector<8x16xbf16>
      %c1 = arith.constant 1 : index
      %c0_44 = arith.constant 0 : index
      %c0_45 = arith.constant 0 : index
      %49 = vector.load %arg6[%c1, %c0_44, %c0_45] : memref<4x16x32xbf16, #tpu.memory_space<vmem>>, vector<1x16x32xbf16>
      %50 = vector.shape_cast %49 : vector<1x16x32xbf16> to vector<16x32xbf16>
      %cst_46 = arith.constant dense<0.000000e+00> : vector<8x32xf32>
      %51 = tpu.matmul %48, %50, %cst_46 {dimension_numbers = #tpu.dot_dimension_numbers<[1], [0], [0], [1], [0, 0, 1, 1], [], []>} : vector<8x16xbf16>, vector<16x32xbf16>, vector<8x32xf32> -> vector<8x32xf32>
      %52 = arith.addf %46, %51 : vector<8x32xf32>
      %53 = vector.extract_strided_slice %41 {offsets = [2, 0, 0], sizes = [1, 8, 16], strides = [1, 1, 1]} : vector<4x8x16xbf16> to vector<1x8x16xbf16>
      %54 = vector.shape_cast %53 : vector<1x8x16xbf16> to vector<8x16xbf16>
      %c2 = arith.constant 2 : index
      %c0_47 = arith.constant 0 : index
      %c0_48 = arith.constant 0 : index
      %55 = vector.load %arg6[%c2, %c0_47, %c0_48] : memref<4x16x32xbf16, #tpu.memory_space<vmem>>, vector<1x16x32xbf16>
      %56 = vector.shape_cast %55 : vector<1x16x32xbf16> to vector<16x32xbf16>
      %cst_49 = arith.constant dense<0.000000e+00> : vector<8x32xf32>
      %57 = tpu.matmul %54, %56, %cst_49 {dimension_numbers = #tpu.dot_dimension_numbers<[1], [0], [0], [1], [0, 0, 1, 1], [], []>} : vector<8x16xbf16>, vector<16x32xbf16>, vector<8x32xf32> -> vector<8x32xf32>
      %58 = arith.addf %52, %57 : vector<8x32xf32>
      %59 = vector.extract_strided_slice %41 {offsets = [3, 0, 0], sizes = [1, 8, 16], strides = [1, 1, 1]} : vector<4x8x16xbf16> to vector<1x8x16xbf16>
      %60 = vector.shape_cast %59 : vector<1x8x16xbf16> to vector<8x16xbf16>
      %c3 = arith.constant 3 : index
      %c0_50 = arith.constant 0 : index
      %c0_51 = arith.constant 0 : index
      %61 = vector.load %arg6[%c3, %c0_50, %c0_51] : memref<4x16x32xbf16, #tpu.memory_space<vmem>>, vector<1x16x32xbf16>
      %62 = vector.shape_cast %61 : vector<1x16x32xbf16> to vector<16x32xbf16>
      %cst_52 = arith.constant dense<0.000000e+00> : vector<8x32xf32>
      %63 = tpu.matmul %60, %62, %cst_52 {dimension_numbers = #tpu.dot_dimension_numbers<[1], [0], [0], [1], [0, 0, 1, 1], [], []>} : vector<8x16xbf16>, vector<16x32xbf16>, vector<8x32xf32> -> vector<8x32xf32>
      %64 = arith.addf %58, %63 : vector<8x32xf32>
      %c0_53 = arith.constant 0 : index
      %c0_54 = arith.constant 0 : index
      %c0_55 = arith.constant 0 : index
      %65 = vector.load %arg7[%c0_53, %c0_54, %c0_55] : memref<1x8x32xf32, #tpu.memory_space<vmem>>, vector<1x8x32xf32>
      %66 = vector.shape_cast %65 : vector<1x8x32xf32> to vector<8x32xf32>
      %67 = vector.shape_cast %64 : vector<8x32xf32> to vector<1x8x32xf32>
      tpu.vector_store %arg7[%c0_53, %c0_54, %c0_55], %67 {strides = array<i32>} : memref<1x8x32xf32, #tpu.memory_space<vmem>>, vector<1x8x32xf32>,
    } else {
    }
    return
  }
  func.func @transform_0(%arg0: i32, %arg1: i32, %arg2: i32) -> (i32, i32, i32, i32) {
    %c0_i32 = arith.constant 0 : i32
    %c0_i32_0 = arith.constant 0 : i32
    %c0_i32_1 = arith.constant 0 : i32
    return %arg0, %c0_i32, %arg1, %c0_i32_0 : i32, i32, i32, i32
  }
  func.func @transform_1(%arg0: i32, %arg1: i32, %arg2: i32) -> (i32, i32, i32, i32) {
    %c0_i32 = arith.constant 0 : i32
    %c0_i32_0 = arith.constant 0 : i32
    %c0_i32_1 = arith.constant 0 : i32
    return %arg0, %c0_i32, %arg2, %c0_i32_0 : i32, i32, i32, i32
  }
  func.func @transform_2(%arg0: i32, %arg1: i32, %arg2: i32) -> (i32, i32, i32, i32) {
    %c0_i32 = arith.constant 0 : i32
    %c0_i32_0 = arith.constant 0 : i32
    %c0_i32_1 = arith.constant 0 : i32
    return %arg0, %c0_i32, %arg2, %c0_i32_0 : i32, i32, i32, i32
  }
  func.func @transform_3(%arg0: i32, %arg1: i32, %arg2: i32) -> (i32, i32, i32) {
    %c0_i32 = arith.constant 0 : i32
    %c0_i32_0 = arith.constant 0 : i32
    %c0_i32_1 = arith.constant 0 : i32
    %c0_i32_2 = arith.constant 0 : i32
    return %c0_i32, %c0_i32_0, %c0_i32_1 : i32, i32, i32
  }
  func.func @transform_4(%arg0: i32, %arg1: i32, %arg2: i32) -> (i32, i32, i32) {
    %c0_i32 = arith.constant 0 : i32
    %c0_i32_0 = arith.constant 0 : i32
    return %arg0, %arg1, %c0_i32 : i32, i32, i32
  }
}

</mosaic_0001>

<llo_original>
// kernel: tpu_custom_call.1
$region0: #{tpu_custom_call.1}
  #allocation0 [shape = 'u32[]', space=smem, size = 0x4, offset = 0x4, fixed_abs, tag = 'smem constant byte address 0x4 - core index']
  #allocation1 [shape = 'u32[144,128]{1,0:T(1,128)}', space=vmem, size = 0x12000, scoped, tag = 'internal scratch']
  #allocation2 [shape = 'f32[4,8,1]{2,1,0:T(8,128)}', space=vmem, size = 0x4000, scoped, tag = 'scratch operand']
  #allocation3 [shape = 'f32[4,8,1]{2,1,0:T(8,128)}', space=vmem, size = 0x4000, scoped, tag = 'scratch operand']
  #allocation4 [shape = 'f32[4,8,16]{2,1,0:T(8,128)}', space=vmem, size = 0x4000, scoped, tag = 'scratch operand']
  %s0 = inlined_call_operand.vmem [shape: bf16[2,4,16,16], index: 0, kind: input, shape index: {}]
  %s1 = inlined_call_operand.vmem [shape: bf16[2,4,256,16], index: 1, kind: input, shape index: {}]
  %s2 = inlined_call_operand.vmem [shape: bf16[2,4,256,16], index: 2, kind: input, shape index: {}]
  %s3 = inlined_call_operand.vmem [shape: bf16[4,16,32], index: 3, kind: input, shape index: {}]
  %s4 = inlined_call_operand.hbm [shape: f32[2,16,32], index: 4, kind: output, shape index: {}]
  %s5 = sld [smem:[#allocation0]]
  $region180: #{tpu_custom_call.1} parent=0
    _
  %s7 = ssub.s32 1, %s5
  %s8 = scalar_select 0, %s7, %s5
  $region1: #{tpu_custom_call.1} parent=0
    #allocation5 [shape = 'u8[16384]{0}', space=vmem, size = 0x4000, scoped, tag = 'input window, operand 0']
    #allocation6 [shape = 'u8[262144]{0}', space=vmem, size = 0x40000, scoped, tag = 'input window, operand 1']
    #allocation7 [shape = 'u8[262144]{0}', space=vmem, size = 0x40000, scoped, tag = 'input window, operand 2']
    #allocation8 [shape = 'u8[8192]{0}', space=vmem, size = 0x2000, scoped, tag = 'output window, operand 0']
    #allocation9 [shape = 's32[2]{0}', space=sflag, size = 0x8, scoped, tag = 'scoped memory for tpu_custom_call.1']
    %9 = vsyncpa [#allocation9], 0
    %s10 = scalar_lea.sflag [#allocation9], 1
    %11 = vsyncpa %s10, 0
    loop: start=0, step=1, limit=10
    $region2: #{tpu_custom_call.1} parent=1 // loop_pre_header
      _
    $region3: #{tpu_custom_call.1} parent=1 // loop_header
      %s13 = sphi 0, %s17
      %p14 = scmp.ge.s32.totalorder %s13, 10
      %s20 = sphi 0, %s39
      %s21 = sphi 0, %s35
      %s22 = sphi 0, %s31
      %s23 = sphi 0, %s20
      %s24 = sphi 0, %s21
      %s25 = sphi 0, %s22
      %s26 = sphi 0, %s23
      %s27 = sphi 0, %s24
      %s28 = sphi 0, %s25
      %s44 = sphi 0, %s46
      %s47 = sphi 0, %s44
      %s48 = sphi 0, %s47
      %s64 = sphi 0, %s48
      %s72 = sphi 0, %s74
      %s75 = sphi 0, %s72
      %s76 = sphi 0, %s75
      %s92 = sphi 0, %s76
      %s100 = sphi 0, %s102
      %s103 = sphi 0, %s100
      %s104 = sphi 0, %s103
      %s120 = sphi 0, %s104
      %s124 = sphi 0, %s124
      %s126 = sphi 0, %s124
      %s127 = sphi 0, %s126
      %s141 = sphi 0, %s127
      %s149 = sphi 0, %s151
      %s152 = sphi 0, %s149
      %s153 = sphi 0, %s152
      %s169 = sphi 0, %s153
    $region4: #{tpu_custom_call.1} parent=1 // loop_header_branch
      %16 = sbr.rel (%p14) target = $region8
    $region5: #{tpu_custom_call.1} parent=1 // loop_body
      %s18 = ssub.s32 %s13, 1
      %s19 = ssub.s32 %s13, 2
      %s29 = sadd.s32 1, %s22
      %p30 = scmp.ge.s32.totalorder %s29, 2
      %s31 = scalar_select %p30, 0, %s29
      %s32 = sadd.s32 1, %s21
      %s33 = scalar_select %p30, %s32, %s21
      %p34 = scmp.ge.s32.totalorder %s33, 2
      %s35 = scalar_select %p34, 0, %s33
      %s36 = sadd.s32 1, %s20
      %s37 = scalar_select %p34, %s36, %s20
      %p38 = scmp.ge.s32.totalorder %s37, 2
      %s39 = scalar_select %p38, 0, %s37
      %s40 = ssub.s32 %s20, %s39
      %s41 = ssub.s32 %s21, %s35
      %s42 = sor.u32 %s40, %s41
      %p43 = scmp.eq.s32.totalorder %s42, 0
      %s45 = sadd.s32 %s44, 1
      %s46 = scalar_select %p43, %s44, %s45
      %p49 = pneg %p43
      %p50 = scmp.eq.s32.totalorder %s13, 7
      %p51 = por %p49, %p50
      %p52 = scmp.ne.s32.totalorder %s44, %s47
      %p53 = scmp.eq.s32.totalorder %s13, 0
      %p54 = por %p52, %p53
      %p55 = scmp.ne.s32.totalorder %s44, %s47
      %p56 = scmp.eq.s32.totalorder %s18, 7
      %p57 = por %p55, %p56
      %p58 = scmp.ne.s32.totalorder %s47, %s48
      %p59 = scmp.eq.s32.totalorder %s18, 0
      %p60 = por %p58, %p59
      %p61 = scmp.ne.s32.totalorder %s47, %s48
      %p62 = scmp.eq.s32.totalorder %s19, 7
      %p63 = por %p61, %p62
      %p65 = scmp.ne.s32.totalorder %s48, %s64
      %p66 = scmp.eq.s32.totalorder %s19, 0
      %p67 = por %p65, %p66
      %s68 = ssub.s32 %s20, %s39
      %s69 = ssub.s32 %s22, %s31
      %s70 = sor.u32 %s68, %s69
      %p71 = scmp.eq.s32.totalorder %s70, 0
      %s73 = sadd.s32 %s72, 1
      %s74 = scalar_select %p71, %s72, %s73
      %p77 = pneg %p71
      %p78 = scmp.eq.s32.totalorder %s13, 7
      %p79 = por %p77, %p78
      %p80 = scmp.ne.s32.totalorder %s72, %s75
      %p81 = scmp.eq.s32.totalorder %s13, 0
      %p82 = por %p80, %p81
      %p83 = scmp.ne.s32.totalorder %s72, %s75
      %p84 = scmp.eq.s32.totalorder %s18, 7
      %p85 = por %p83, %p84
      %p86 = scmp.ne.s32.totalorder %s75, %s76
      %p87 = scmp.eq.s32.totalorder %s18, 0
      %p88 = por %p86, %p87
      %p89 = scmp.ne.s32.totalorder %s75, %s76
      %p90 = scmp.eq.s32.totalorder %s19, 7
      %p91 = por %p89, %p90
      %p93 = scmp.ne.s32.totalorder %s76, %s92
      %p94 = scmp.eq.s32.totalorder %s19, 0
      %p95 = por %p93, %p94
      %s96 = ssub.s32 %s20, %s39
      %s97 = ssub.s32 %s22, %s31
      %s98 = sor.u32 %s96, %s97
      %p99 = scmp.eq.s32.totalorder %s98, 0
      %s101 = sadd.s32 %s100, 1
      %s102 = scalar_select %p99, %s100, %s101
      %p105 = pneg %p99
      %p106 = scmp.eq.s32.totalorder %s13, 7
      %p107 = por %p105, %p106
      %p108 = scmp.ne.s32.totalorder %s100, %s103
      %p109 = scmp.eq.s32.totalorder %s13, 0
      %p110 = por %p108, %p109
      %p111 = scmp.ne.s32.totalorder %s100, %s103
      %p112 = scmp.eq.s32.totalorder %s18, 7
      %p113 = por %p111, %p112
      %p114 = scmp.ne.s32.totalorder %s103, %s104
      %p115 = scmp.eq.s32.totalorder %s18, 0
      %p116 = por %p114, %p115
      %p117 = scmp.ne.s32.totalorder %s103, %s104
      %p118 = scmp.eq.s32.totalorder %s19, 7
      %p119 = por %p117, %p118
      %p121 = scmp.ne.s32.totalorder %s104, %s120
      %p122 = scmp.eq.s32.totalorder %s19, 0
      %p123 = por %p121, %p122
      %s125 = sadd.s32 %s124, 1
      %p128 = scmp.eq.s32.totalorder %s13, 7
      %p129 = scmp.ne.s32.totalorder %s124, %s126
      %p130 = scmp.eq.s32.totalorder %s13, 0
      %p131 = por %p129, %p130
      %p132 = scmp.ne.s32.totalorder %s124, %s126
      %p133 = scmp.eq.s32.totalorder %s18, 7
      %p134 = por %p132, %p133
      %p135 = scmp.ne.s32.totalorder %s126, %s127
      %p136 = scmp.eq.s32.totalorder %s18, 0
      %p137 = por %p135, %p136
      %p138 = scmp.ne.s32.totalorder %s126, %s127
      %p139 = scmp.eq.s32.totalorder %s19, 7
      %p140 = por %p138, %p139
      %p142 = scmp.ne.s32.totalorder %s127, %s141
      %p143 = scmp.eq.s32.totalorder %s19, 0
      %p144 = por %p142, %p143
      %s145 = ssub.s32 %s20, %s39
      %s146 = ssub.s32 %s21, %s35
      %s147 = sor.u32 %s145, %s146
      %p148 = scmp.eq.s32.totalorder %s147, 0
      %s150 = sadd.s32 %s149, 1
      %s151 = scalar_select %p148, %s149, %s150
      %p154 = pneg %p148
      %p155 = scmp.eq.s32.totalorder %s13, 7
      %p156 = por %p154, %p155
      %p157 = scmp.ne.s32.totalorder %s149, %s152
      %p158 = scmp.eq.s32.totalorder %s13, 0
      %p159 = por %p157, %p158
      %p160 = scmp.ne.s32.totalorder %s149, %s152
      %p161 = scmp.eq.s32.totalorder %s18, 7
      %p162 = por %p160, %p161
      %p163 = scmp.ne.s32.totalorder %s152, %s153
      %p164 = scmp.eq.s32.totalorder %s18, 0
      %p165 = por %p163, %p164
      %p166 = scmp.ne.s32.totalorder %s152, %s153
      %p167 = scmp.eq.s32.totalorder %s19, 7
      %p168 = por %p166, %p167
      %p170 = scmp.ne.s32.totalorder %s153, %s169
      %p171 = scmp.eq.s32.totalorder %s19, 0
      %p172 = por %p170, %p171
      %p173 = scmp.le.s32.totalorder 1, %s13
      %p174 = scmp.lt.s32.totalorder %s13, 9
      %p175 = pnand %p173, %p174
      %p176 = pneg %p175
      // Predicated region
      $region9: #{tpu_custom_call.1} parent=5 // pred_check
        _
      $region10: #{tpu_custom_call.1} parent=5 // pred_check_branch
        %178 = sbr.rel (%p175) target = $region12
      $region11: #{tpu_custom_call.1} parent=5 // pred_region
        %s179 = ssub.s32 %s13, 1
        // Predicated region
        $region13: #{tpu_custom_call.1} parent=11 // pred_check
          %p180 = pneg %p137
        $region14: #{tpu_custom_call.1} parent=11 // pred_check_branch
          %182 = sbr.rel (%p180) target = $region16
        $region15: #{tpu_custom_call.1} parent=11 // pred_region
          _
        $region16: #{tpu_custom_call.1} parent=11 // pred_fallthru
          _
      $region12: #{tpu_custom_call.1} parent=5 // pred_fallthru
        _
      %p183 = scmp.lt.s32.totalorder %s13, 8
      // Predicated region
      $region17: #{tpu_custom_call.1} parent=5 // pred_check
        %p184 = pneg %p183
      $region18: #{tpu_custom_call.1} parent=5 // pred_check_branch
        %186 = sbr.rel (%p184) target = $region20
      $region19: #{tpu_custom_call.1} parent=5 // pred_region
        // Predicated region
        $region21: #{tpu_custom_call.1} parent=19 // pred_check
          %p187 = pneg %p54
        $region22: #{tpu_custom_call.1} parent=19 // pred_check_branch
          %189 = sbr.rel (%p187) target = $region24
        $region23: #{tpu_custom_call.1} parent=19 // pred_region
          %s190 = sand.u32 %s44, 1
          %s191 = sand.u32 %s44, 1
          %s192 = smul.addr %s191, 16
          %s193 = scalar_lea.vmem [#allocation5], %s192
          %s194 = smul.addr %s20, 8
          %s195 = sadd.s32 %s21, %s194
          %s196 = smul.addr %s195, 4
          %s197 = scalar_lea.vmem %s0, %s196
          // Predicated region
          $region25: #{tpu_custom_call.1} parent=23 // pred_check
            _
          $region26: #{tpu_custom_call.1} parent=23 // pred_check_branch
            %199 = sbr.rel (0) target = $region28
          $region27: #{tpu_custom_call.1} parent=23 // pred_region
            // Predicated region
            $region29: #{tpu_custom_call.1} parent=27 // pred_check
              _
            $region30: #{tpu_custom_call.1} parent=27 // pred_check_branch
              %201 = sbr.rel target = $region32
            $region31: #{tpu_custom_call.1} parent=27 // pred_region
              // Predicated region
              $region44: #{tpu_custom_call.1} parent=31 // pred_check
                _
              $region45: #{tpu_custom_call.1} parent=31 // pred_check_branch
                %222 = sbr.rel (0) target = $region47
              $region46: #{tpu_custom_call.1} parent=31 // pred_region
                loop: start=0, step=1, limit=1
                $region48: #{tpu_custom_call.1} parent=46 // loop_pre_header
                  _
                $region49: #{tpu_custom_call.1} parent=46 // loop_header
                  %s224 = sphi 0, %s228
                  %p225 = scmp.ge.s32.totalorder %s224, 1
                  %s229 = sphi %s197, %s197
                  %s230 = sphi %s193, %s193
                $region50: #{tpu_custom_call.1} parent=46 // loop_header_branch
                  %227 = sbr.rel (%p225) target = $region54
                $region51: #{tpu_custom_call.1} parent=46 // loop_body
                  _
                $region52: #{tpu_custom_call.1} parent=46 // loop_footer
                  %s228 = sadd.s32 1, %s224
                $region53: #{tpu_custom_call.1} parent=46 // loop_footer_branch
                  %223 = sbr.rel target = $region49
                $region54: #{tpu_custom_call.1} parent=46 // loop_exit
                  _
                loop: start=0, step=1, limit=1
                $region55: #{tpu_custom_call.1} parent=46 // loop_pre_header
                  _
                $region56: #{tpu_custom_call.1} parent=46 // loop_header
                  %s233 = sphi 0, %s237
                  %p234 = scmp.ge.s32.totalorder %s233, 1
                  %s238 = sphi %s197, %s197
                  %s239 = sphi %s193, %s193
                $region57: #{tpu_custom_call.1} parent=46 // loop_header_branch
                  %236 = sbr.rel (%p234) target = $region61
                $region58: #{tpu_custom_call.1} parent=46 // loop_body
                  %v240 = vld [vmem:[%s238] sm:$0xf]
                  %241 = vst [vmem:[%s239] sm:$0xf] %v240
                  %v242 = vld [vmem:[%s238 + $0x8] sm:$0xf]
                  %243 = vst [vmem:[%s239 + $0x4] sm:$0xf] %v242
                  %v244 = vld [vmem:[%s238 + $0x10] sm:$0xf]
                  %245 = vst [vmem:[%s239 + $0x8] sm:$0xf] %v244
                  %v246 = vld [vmem:[%s238 + $0x18] sm:$0xf]
                  %247 = vst [vmem:[%s239 + $0xc] sm:$0xf] %v246
                $region59: #{tpu_custom_call.1} parent=46 // loop_footer
                  %s237 = sadd.s32 1, %s233
                $region60: #{tpu_custom_call.1} parent=46 // loop_footer_branch
                  %232 = sbr.rel target = $region56
                $region61: #{tpu_custom_call.1} parent=46 // loop_exit
                  _
              $region47: #{tpu_custom_call.1} parent=31 // pred_fallthru
                _
            $region32: #{tpu_custom_call.1} parent=27 // pred_fallthru
              _
            // Predicated region
            $region33: #{tpu_custom_call.1} parent=27 // pred_check
              _
            $region34: #{tpu_custom_call.1} parent=27 // pred_check_branch
              %203 = sbr.rel (0) target = $region36
            $region35: #{tpu_custom_call.1} parent=27 // pred_region
              loop: start=0, step=1, limit=1
              $region37: #{tpu_custom_call.1} parent=35 // loop_pre_header
                _
              $region38: #{tpu_custom_call.1} parent=35 // loop_header
                %s206 = sphi 0, %s210
                %p207 = scmp.ge.s32.totalorder %s206, 1
                %s211 = sphi %s197, %s197
                %s212 = sphi %s193, %s193
              $region39: #{tpu_custom_call.1} parent=35 // loop_header_branch
                %209 = sbr.rel (%p207) target = $region43
              $region40: #{tpu_custom_call.1} parent=35 // loop_body
                %v213 = vld [vmem:[%s211] sm:$0xf]
                %214 = vst [vmem:[%s212] sm:$0xf] %v213
                %v215 = vld [vmem:[%s211 + $0x8] sm:$0xf]
                %216 = vst [vmem:[%s212 + $0x4] sm:$0xf] %v215
                %v217 = vld [vmem:[%s211 + $0x10] sm:$0xf]
                %218 = vst [vmem:[%s212 + $0x8] sm:$0xf] %v217
                %v219 = vld [vmem:[%s211 + $0x18] sm:$0xf]
                %220 = vst [vmem:[%s212 + $0xc] sm:$0xf] %v219
              $region41: #{tpu_custom_call.1} parent=35 // loop_footer
                %s210 = sadd.s32 1, %s206
              $region42: #{tpu_custom_call.1} parent=35 // loop_footer_branch
                %205 = sbr.rel target = $region38
              $region43: #{tpu_custom_call.1} parent=35 // loop_exit
                _
            $region36: #{tpu_custom_call.1} parent=27 // pred_fallthru
              _
          $region28: #{tpu_custom_call.1} parent=23 // pred_fallthru
            _
          %248 = vnop
        $region24: #{tpu_custom_call.1} parent=19 // pred_fallthru
          _
        // Predicated region
        $region62: #{tpu_custom_call.1} parent=19 // pred_check
          %p249 = pneg %p82
        $region63: #{tpu_custom_call.1} parent=19 // pred_check_branch
          %251 = sbr.rel (%p249) target = $region65
        $region64: #{tpu_custom_call.1} parent=19 // pred_region
          %s252 = sand.u32 %s72, 1
          %s253 = sand.u32 %s72, 1
          %s254 = smul.addr %s253, 256
          %s255 = scalar_lea.vmem [#allocation6], %s254
          %s256 = smul.u32 16, %s22
          %s257 = smul.addr %s20, 128
          %s258 = sadd.s32 %s256, %s257
          %s259 = smul.addr %s258, 4
          %s260 = scalar_lea.vmem %s1, %s259
          // Predicated region
          $region66: #{tpu_custom_call.1} parent=64 // pred_check
            _
          $region67: #{tpu_custom_call.1} parent=64 // pred_check_branch
            %262 = sbr.rel (0) target = $region69
          $region68: #{tpu_custom_call.1} parent=64 // pred_region
            // Predicated region
            $region70: #{tpu_custom_call.1} parent=68 // pred_check
              _
            $region71: #{tpu_custom_call.1} parent=68 // pred_check_branch
              %264 = sbr.rel target = $region73
            $region72: #{tpu_custom_call.1} parent=68 // pred_region
              // Predicated region
              $region85: #{tpu_custom_call.1} parent=72 // pred_check
                _
              $region86: #{tpu_custom_call.1} parent=72 // pred_check_branch
                %405 = sbr.rel (0) target = $region88
              $region87: #{tpu_custom_call.1} parent=72 // pred_region
                loop: start=0, step=1, limit=1
                $region89: #{tpu_custom_call.1} parent=87 // loop_pre_header
                  _
                $region90: #{tpu_custom_call.1} parent=87 // loop_header
                  %s407 = sphi 0, %s411
                  %p408 = scmp.ge.s32.totalorder %s407, 1
                  %s412 = sphi %s260, %s260
                  %s413 = sphi %s255, %s255
                $region91: #{tpu_custom_call.1} parent=87 // loop_header_branch
                  %410 = sbr.rel (%p408) target = $region95
                $region92: #{tpu_custom_call.1} parent=87 // loop_body
                  _
                $region93: #{tpu_custom_call.1} parent=87 // loop_footer
                  %s411 = sadd.s32 1, %s407
                $region94: #{tpu_custom_call.1} parent=87 // loop_footer_branch
                  %406 = sbr.rel target = $region90
                $region95: #{tpu_custom_call.1} parent=87 // loop_exit
                  _
                loop: start=0, step=1, limit=1
                $region96: #{tpu_custom_call.1} parent=87 // loop_pre_header
                  _
                $region97: #{tpu_custom_call.1} parent=87 // loop_header
                  %s416 = sphi 0, %s420
                  %p417 = scmp.ge.s32.totalorder %s416, 1
                  %s421 = sphi %s260, %s260
                  %s422 = sphi %s255, %s255
                $region98: #{tpu_custom_call.1} parent=87 // loop_header_branch
                  %419 = sbr.rel (%p417) target = $region102
                $region99: #{tpu_custom_call.1} parent=87 // loop_body
                  %v423 = vld [vmem:[%s421] sm:$0xf]
                  %424 = vst [vmem:[%s422] sm:$0xf] %v423
                  %v425 = vld [vmem:[%s421 + $0x4] sm:$0xf]
                  %426 = vst [vmem:[%s422 + $0x4] sm:$0xf] %v425
                  %v427 = vld [vmem:[%s421 + $0x8] sm:$0xf]
                  %428 = vst [vmem:[%s422 + $0x8] sm:$0xf] %v427
                  %v429 = vld [vmem:[%s421 + $0xc] sm:$0xf]
                  %430 = vst [vmem:[%s422 + $0xc] sm:$0xf] %v429
                  %v431 = vld [vmem:[%s421 + $0x10] sm:$0xf]
                  %432 = vst [vmem:[%s422 + $0x10] sm:$0xf] %v431
                  %v433 = vld [vmem:[%s421 + $0x14] sm:$0xf]
                  %434 = vst [vmem:[%s422 + $0x14] sm:$0xf] %v433
                  %v435 = vld [vmem:[%s421 + $0x18] sm:$0xf]
                  %436 = vst [vmem:[%s422 + $0x18] sm:$0xf] %v435
                  %v437 = vld [vmem:[%s421 + $0x1c] sm:$0xf]
                  %438 = vst [vmem:[%s422 + $0x1c] sm:$0xf] %v437
                  %v439 = vld [vmem:[%s421 + $0x20] sm:$0xf]
                  %440 = vst [vmem:[%s422 + $0x20] sm:$0xf] %v439
                  %v441 = vld [vmem:[%s421 + $0x24] sm:$0xf]
                  %442 = vst [vmem:[%s422 + $0x24] sm:$0xf] %v441
                  %v443 = vld [vmem:[%s421 + $0x28] sm:$0xf]
                  %444 = vst [vmem:[%s422 + $0x28] sm:$0xf] %v443
                  %v445 = vld [vmem:[%s421 + $0x2c] sm:$0xf]
                  %446 = vst [vmem:[%s422 + $0x2c] sm:$0xf] %v445
                  %v447 = vld [vmem:[%s421 + $0x30] sm:$0xf]
                  %448 = vst [vmem:[%s422 + $0x30] sm:$0xf] %v447
                  %v449 = vld [vmem:[%s421 + $0x34] sm:$0xf]
                  %450 = vst [vmem:[%s422 + $0x34] sm:$0xf] %v449
                  %v451 = vld [vmem:[%s421 + $0x38] sm:$0xf]
                  %452 = vst [vmem:[%s422 + $0x38] sm:$0xf] %v451
                  %v453 = vld [vmem:[%s421 + $0x3c] sm:$0xf]
                  %454 = vst [vmem:[%s422 + $0x3c] sm:$0xf] %v453
                  %v455 = vld [vmem:[%s421 + $0x80] sm:$0xf]
                  %456 = vst [vmem:[%s422 + $0x40] sm:$0xf] %v455
                  %v457 = vld [vmem:[%s421 + $0x84] sm:$0xf]
                  %458 = vst [vmem:[%s422 + $0x44] sm:$0xf] %v457
                  %v459 = vld [vmem:[%s421 + $0x88] sm:$0xf]
                  %460 = vst [vmem:[%s422 + $0x48] sm:$0xf] %v459
                  %v461 = vld [vmem:[%s421 + $0x8c] sm:$0xf]
                  %462 = vst [vmem:[%s422 + $0x4c] sm:$0xf] %v461
                  %v463 = vld [vmem:[%s421 + $0x90] sm:$0xf]
                  %464 = vst [vmem:[%s422 + $0x50] sm:$0xf] %v463
                  %v465 = vld [vmem:[%s421 + $0x94] sm:$0xf]
                  %466 = vst [vmem:[%s422 + $0x54] sm:$0xf] %v465
                  %v467 = vld [vmem:[%s421 + $0x98] sm:$0xf]
                  %468 = vst [vmem:[%s422 + $0x58] sm:$0xf] %v467
                  %v469 = vld [vmem:[%s421 + $0x9c] sm:$0xf]
                  %470 = vst [vmem:[%s422 + $0x5c] sm:$0xf] %v469
                  %v471 = vld [vmem:[%s421 + $0xa0] sm:$0xf]
                  %472 = vst [vmem:[%s422 + $0x60] sm:$0xf] %v471
                  %v473 = vld [vmem:[%s421 + $0xa4] sm:$0xf]
                  %474 = vst [vmem:[%s422 + $0x64] sm:$0xf] %v473
                  %v475 = vld [vmem:[%s421 + $0xa8] sm:$0xf]
                  %476 = vst [vmem:[%s422 + $0x68] sm:$0xf] %v475
                  %v477 = vld [vmem:[%s421 + $0xac] sm:$0xf]
                  %478 = vst [vmem:[%s422 + $0x6c] sm:$0xf] %v477
                  %v479 = vld [vmem:[%s421 + $0xb0] sm:$0xf]
                  %480 = vst [vmem:[%s422 + $0x70] sm:$0xf] %v479
                  %v481 = vld [vmem:[%s421 + $0xb4] sm:$0xf]
                  %482 = vst [vmem:[%s422 + $0x74] sm:$0xf] %v481
                  %v483 = vld [vmem:[%s421 + $0xb8] sm:$0xf]
                  %484 = vst [vmem:[%s422 + $0x78] sm:$0xf] %v483
                  %v485 = vld [vmem:[%s421 + $0xbc] sm:$0xf]
                  %486 = vst [vmem:[%s422 + $0x7c] sm:$0xf] %v485
                  %v487 = vld [vmem:[%s421 + $0x100] sm:$0xf]
                  %488 = vst [vmem:[%s422 + $0x80] sm:$0xf] %v487
                  %v489 = vld [vmem:[%s421 + $0x104] sm:$0xf]
                  %490 = vst [vmem:[%s422 + $0x84] sm:$0xf] %v489
                  %v491 = vld [vmem:[%s421 + $0x108] sm:$0xf]
                  %492 = vst [vmem:[%s422 + $0x88] sm:$0xf] %v491
                  %v493 = vld [vmem:[%s421 + $0x10c] sm:$0xf]
                  %494 = vst [vmem:[%s422 + $0x8c] sm:$0xf] %v493
                  %v495 = vld [vmem:[%s421 + $0x110] sm:$0xf]
                  %496 = vst [vmem:[%s422 + $0x90] sm:$0xf] %v495
                  %v497 = vld [vmem:[%s421 + $0x114] sm:$0xf]
                  %498 = vst [vmem:[%s422 + $0x94] sm:$0xf] %v497
                  %v499 = vld [vmem:[%s421 + $0x118] sm:$0xf]
                  %500 = vst [vmem:[%s422 + $0x98] sm:$0xf] %v499
                  %v501 = vld [vmem:[%s421 + $0x11c] sm:$0xf]
                  %502 = vst [vmem:[%s422 + $0x9c] sm:$0xf] %v501
                  %v503 = vld [vmem:[%s421 + $0x120] sm:$0xf]
                  %504 = vst [vmem:[%s422 + $0xa0] sm:$0xf] %v503
                  %v505 = vld [vmem:[%s421 + $0x124] sm:$0xf]
                  %506 = vst [vmem:[%s422 + $0xa4] sm:$0xf] %v505
                  %v507 = vld [vmem:[%s421 + $0x128] sm:$0xf]
                  %508 = vst [vmem:[%s422 + $0xa8] sm:$0xf] %v507
                  %v509 = vld [vmem:[%s421 + $0x12c] sm:$0xf]
                  %510 = vst [vmem:[%s422 + $0xac] sm:$0xf] %v509
                  %v511 = vld [vmem:[%s421 + $0x130] sm:$0xf]
                  %512 = vst [vmem:[%s422 + $0xb0] sm:$0xf] %v511
                  %v513 = vld [vmem:[%s421 + $0x134] sm:$0xf]
                  %514 = vst [vmem:[%s422 + $0xb4] sm:$0xf] %v513
                  %v515 = vld [vmem:[%s421 + $0x138] sm:$0xf]
                  %516 = vst [vmem:[%s422 + $0xb8] sm:$0xf] %v515
                  %v517 = vld [vmem:[%s421 + $0x13c] sm:$0xf]
                  %518 = vst [vmem:[%s422 + $0xbc] sm:$0xf] %v517
                  %v519 = vld [vmem:[%s421 + $0x180] sm:$0xf]
                  %520 = vst [vmem:[%s422 + $0xc0] sm:$0xf] %v519
                  %v521 = vld [vmem:[%s421 + $0x184] sm:$0xf]
                  %522 = vst [vmem:[%s422 + $0xc4] sm:$0xf] %v521
                  %v523 = vld [vmem:[%s421 + $0x188] sm:$0xf]
                  %524 = vst [vmem:[%s422 + $0xc8] sm:$0xf] %v523
                  %v525 = vld [vmem:[%s421 + $0x18c] sm:$0xf]
                  %526 = vst [vmem:[%s422 + $0xcc] sm:$0xf] %v525
                  %v527 = vld [vmem:[%s421 + $0x190] sm:$0xf]
                  %528 = vst [vmem:[%s422 + $0xd0] sm:$0xf] %v527
                  %v529 = vld [vmem:[%s421 + $0x194] sm:$0xf]
                  %530 = vst [vmem:[%s422 + $0xd4] sm:$0xf] %v529
                  %v531 = vld [vmem:[%s421 + $0x198] sm:$0xf]
                  %532 = vst [vmem:[%s422 + $0xd8] sm:$0xf] %v531
                  %v533 = vld [vmem:[%s421 + $0x19c] sm:$0xf]
                  %534 = vst [vmem:[%s422 + $0xdc] sm:$0xf] %v533
                  %v535 = vld [vmem:[%s421 + $0x1a0] sm:$0xf]
                  %536 = vst [vmem:[%s422 + $0xe0] sm:$0xf] %v535
                  %v537 = vld [vmem:[%s421 + $0x1a4] sm:$0xf]
                  %538 = vst [vmem:[%s422 + $0xe4] sm:$0xf] %v537
                  %v539 = vld [vmem:[%s421 + $0x1a8] sm:$0xf]
                  %540 = vst [vmem:[%s422 + $0xe8] sm:$0xf] %v539
                  %v541 = vld [vmem:[%s421 + $0x1ac] sm:$0xf]
                  %542 = vst [vmem:[%s422 + $0xec] sm:$0xf] %v541
                  %v543 = vld [vmem:[%s421 + $0x1b0] sm:$0xf]
                  %544 = vst [vmem:[%s422 + $0xf0] sm:$0xf] %v543
                  %v545 = vld [vmem:[%s421 + $0x1b4] sm:$0xf]
                  %546 = vst [vmem:[%s422 + $0xf4] sm:$0xf] %v545
                  %v547 = vld [vmem:[%s421 + $0x1b8] sm:$0xf]
                  %548 = vst [vmem:[%s422 + $0xf8] sm:$0xf] %v547
                  %v549 = vld [vmem:[%s421 + $0x1bc] sm:$0xf]
                  %550 = vst [vmem:[%s422 + $0xfc] sm:$0xf] %v549
                $region100: #{tpu_custom_call.1} parent=87 // loop_footer
                  %s420 = sadd.s32 1, %s416
                $region101: #{tpu_custom_call.1} parent=87 // loop_footer_branch
                  %415 = sbr.rel target = $region97
                $region102: #{tpu_custom_call.1} parent=87 // loop_exit
                  _
              $region88: #{tpu_custom_call.1} parent=72 // pred_fallthru
                _
            $region73: #{tpu_custom_call.1} parent=68 // pred_fallthru
              _
            // Predicated region
            $region74: #{tpu_custom_call.1} parent=68 // pred_check
              _
            $region75: #{tpu_custom_call.1} parent=68 // pred_check_branch
              %266 = sbr.rel (0) target = $region77
            $region76: #{tpu_custom_call.1} parent=68 // pred_region
              loop: start=0, step=1, limit=1
              $region78: #{tpu_custom_call.1} parent=76 // loop_pre_header
                _
              $region79: #{tpu_custom_call.1} parent=76 // loop_header
                %s269 = sphi 0, %s273
                %p270 = scmp.ge.s32.totalorder %s269, 1
                %s274 = sphi %s260, %s260
                %s275 = sphi %s255, %s255
              $region80: #{tpu_custom_call.1} parent=76 // loop_header_branch
                %272 = sbr.rel (%p270) target = $region84
              $region81: #{tpu_custom_call.1} parent=76 // loop_body
                %v276 = vld [vmem:[%s274] sm:$0xf]
                %277 = vst [vmem:[%s275] sm:$0xf] %v276
                %v278 = vld [vmem:[%s274 + $0x4] sm:$0xf]
                %279 = vst [vmem:[%s275 + $0x4] sm:$0xf] %v278
                %v280 = vld [vmem:[%s274 + $0x8] sm:$0xf]
                %281 = vst [vmem:[%s275 + $0x8] sm:$0xf] %v280
                %v282 = vld [vmem:[%s274 + $0xc] sm:$0xf]
                %283 = vst [vmem:[%s275 + $0xc] sm:$0xf] %v282
                %v284 = vld [vmem:[%s274 + $0x10] sm:$0xf]
                %285 = vst [vmem:[%s275 + $0x10] sm:$0xf] %v284
                %v286 = vld [vmem:[%s274 + $0x14] sm:$0xf]
                %287 = vst [vmem:[%s275 + $0x14] sm:$0xf] %v286
                %v288 = vld [vmem:[%s274 + $0x18] sm:$0xf]
                %289 = vst [vmem:[%s275 + $0x18] sm:$0xf] %v288
                %v290 = vld [vmem:[%s274 + $0x1c] sm:$0xf]
                %291 = vst [vmem:[%s275 + $0x1c] sm:$0xf] %v290
                %v292 = vld [vmem:[%s274 + $0x20] sm:$0xf]
                %293 = vst [vmem:[%s275 + $0x20] sm:$0xf] %v292
                %v294 = vld [vmem:[%s274 + $0x24] sm:$0xf]
                %295 = vst [vmem:[%s275 + $0x24] sm:$0xf] %v294
                %v296 = vld [vmem:[%s274 + $0x28] sm:$0xf]
                %297 = vst [vmem:[%s275 + $0x28] sm:$0xf] %v296
                %v298 = vld [vmem:[%s274 + $0x2c] sm:$0xf]
                %299 = vst [vmem:[%s275 + $0x2c] sm:$0xf] %v298
                %v300 = vld [vmem:[%s274 + $0x30] sm:$0xf]
                %301 = vst [vmem:[%s275 + $0x30] sm:$0xf] %v300
                %v302 = vld [vmem:[%s274 + $0x34] sm:$0xf]
                %303 = vst [vmem:[%s275 + $0x34] sm:$0xf] %v302
                %v304 = vld [vmem:[%s274 + $0x38] sm:$0xf]
                %305 = vst [vmem:[%s275 + $0x38] sm:$0xf] %v304
                %v306 = vld [vmem:[%s274 + $0x3c] sm:$0xf]
                %307 = vst [vmem:[%s275 + $0x3c] sm:$0xf] %v306
                %v308 = vld [vmem:[%s274 + $0x80] sm:$0xf]
                %309 = vst [vmem:[%s275 + $0x40] sm:$0xf] %v308
                %v310 = vld [vmem:[%s274 + $0x84] sm:$0xf]
                %311 = vst [vmem:[%s275 + $0x44] sm:$0xf] %v310
                %v312 = vld [vmem:[%s274 + $0x88] sm:$0xf]
                %313 = vst [vmem:[%s275 + $0x48] sm:$0xf] %v312
                %v314 = vld [vmem:[%s274 + $0x8c] sm:$0xf]
                %315 = vst [vmem:[%s275 + $0x4c] sm:$0xf] %v314
                %v316 = vld [vmem:[%s274 + $0x90] sm:$0xf]
                %317 = vst [vmem:[%s275 + $0x50] sm:$0xf] %v316
                %v318 = vld [vmem:[%s274 + $0x94] sm:$0xf]
                %319 = vst [vmem:[%s275 + $0x54] sm:$0xf] %v318
                %v320 = vld [vmem:[%s274 + $0x98] sm:$0xf]
                %321 = vst [vmem:[%s275 + $0x58] sm:$0xf] %v320
                %v322 = vld [vmem:[%s274 + $0x9c] sm:$0xf]
                %323 = vst [vmem:[%s275 + $0x5c] sm:$0xf] %v322
                %v324 = vld [vmem:[%s274 + $0xa0] sm:$0xf]
                %325 = vst [vmem:[%s275 + $0x60] sm:$0xf] %v324
                %v326 = vld [vmem:[%s274 + $0xa4] sm:$0xf]
                %327 = vst [vmem:[%s275 + $0x64] sm:$0xf] %v326
                %v328 = vld [vmem:[%s274 + $0xa8] sm:$0xf]
                %329 = vst [vmem:[%s275 + $0x68] sm:$0xf] %v328
                %v330 = vld [vmem:[%s274 + $0xac] sm:$0xf]
                %331 = vst [vmem:[%s275 + $0x6c] sm:$0xf] %v330
                %v332 = vld [vmem:[%s274 + $0xb0] sm:$0xf]
                %333 = vst [vmem:[%s275 + $0x70] sm:$0xf] %v332
                %v334 = vld [vmem:[%s274 + $0xb4] sm:$0xf]
                %335 = vst [vmem:[%s275 + $0x74] sm:$0xf] %v334
                %v336 = vld [vmem:[%s274 + $0xb8] sm:$0xf]
                %337 = vst [vmem:[%s275 + $0x78] sm:$0xf] %v336
                %v338 = vld [vmem:[%s274 + $0xbc] sm:$0xf]
                %339 = vst [vmem:[%s275 + $0x7c] sm:$0xf] %v338
                %v340 = vld [vmem:[%s274 + $0x100] sm:$0xf]
                %341 = vst [vmem:[%s275 + $0x80] sm:$0xf] %v340
                %v342 = vld [vmem:[%s274 + $0x104] sm:$0xf]
                %343 = vst [vmem:[%s275 + $0x84] sm:$0xf] %v342
                %v344 = vld [vmem:[%s274 + $0x108] sm:$0xf]
                %345 = vst [vmem:[%s275 + $0x88] sm:$0xf] %v344
                %v346 = vld [vmem:[%s274 + $0x10c] sm:$0xf]
                %347 = vst [vmem:[%s275 + $0x8c] sm:$0xf] %v346
                %v348 = vld [vmem:[%s274 + $0x110] sm:$0xf]
                %349 = vst [vmem:[%s275 + $0x90] sm:$0xf] %v348
                %v350 = vld [vmem:[%s274 + $0x114] sm:$0xf]
                %351 = vst [vmem:[%s275 + $0x94] sm:$0xf] %v350
                %v352 = vld [vmem:[%s274 + $0x118] sm:$0xf]
                %353 = vst [vmem:[%s275 + $0x98] sm:$0xf] %v352
                %v354 = vld [vmem:[%s274 + $0x11c] sm:$0xf]
                %355 = vst [vmem:[%s275 + $0x9c] sm:$0xf] %v354
                %v356 = vld [vmem:[%s274 + $0x120] sm:$0xf]
                %357 = vst [vmem:[%s275 + $0xa0] sm:$0xf] %v356
                %v358 = vld [vmem:[%s274 + $0x124] sm:$0xf]
                %359 = vst [vmem:[%s275 + $0xa4] sm:$0xf] %v358
                %v360 = vld [vmem:[%s274 + $0x128] sm:$0xf]
                %361 = vst [vmem:[%s275 + $0xa8] sm:$0xf] %v360
                %v362 = vld [vmem:[%s274 + $0x12c] sm:$0xf]
                %363 = vst [vmem:[%s275 + $0xac] sm:$0xf] %v362
                %v364 = vld [vmem:[%s274 + $0x130] sm:$0xf]
                %365 = vst [vmem:[%s275 + $0xb0] sm:$0xf] %v364
                %v366 = vld [vmem:[%s274 + $0x134] sm:$0xf]
                %367 = vst [vmem:[%s275 + $0xb4] sm:$0xf] %v366
                %v368 = vld [vmem:[%s274 + $0x138] sm:$0xf]
                %369 = vst [vmem:[%s275 + $0xb8] sm:$0xf] %v368
                %v370 = vld [vmem:[%s274 + $0x13c] sm:$0xf]
                %371 = vst [vmem:[%s275 + $0xbc] sm:$0xf] %v370
                %v372 = vld [vmem:[%s274 + $0x180] sm:$0xf]
                %373 = vst [vmem:[%s275 + $0xc0] sm:$0xf] %v372
                %v374 = vld [vmem:[%s274 + $0x184] sm:$0xf]
                %375 = vst [vmem:[%s275 + $0xc4] sm:$0xf] %v374
                %v376 = vld [vmem:[%s274 + $0x188] sm:$0xf]
                %377 = vst [vmem:[%s275 + $0xc8] sm:$0xf] %v376
                %v378 = vld [vmem:[%s274 + $0x18c] sm:$0xf]
                %379 = vst [vmem:[%s275 + $0xcc] sm:$0xf] %v378
                %v380 = vld [vmem:[%s274 + $0x190] sm:$0xf]
                %381 = vst [vmem:[%s275 + $0xd0] sm:$0xf] %v380
                %v382 = vld [vmem:[%s274 + $0x194] sm:$0xf]
                %383 = vst [vmem:[%s275 + $0xd4] sm:$0xf] %v382
                %v384 = vld [vmem:[%s274 + $0x198] sm:$0xf]
                %385 = vst [vmem:[%s275 + $0xd8] sm:$0xf] %v384
                %v386 = vld [vmem:[%s274 + $0x19c] sm:$0xf]
                %387 = vst [vmem:[%s275 + $0xdc] sm:$0xf] %v386
                %v388 = vld [vmem:[%s274 + $0x1a0] sm:$0xf]
                %389 = vst [vmem:[%s275 + $0xe0] sm:$0xf] %v388
                %v390 = vld [vmem:[%s274 + $0x1a4] sm:$0xf]
                %391 = vst [vmem:[%s275 + $0xe4] sm:$0xf] %v390
                %v392 = vld [vmem:[%s274 + $0x1a8] sm:$0xf]
                %393 = vst [vmem:[%s275 + $0xe8] sm:$0xf] %v392
                %v394 = vld [vmem:[%s274 + $0x1ac] sm:$0xf]
                %395 = vst [vmem:[%s275 + $0xec] sm:$0xf] %v394
                %v396 = vld [vmem:[%s274 + $0x1b0] sm:$0xf]
                %397 = vst [vmem:[%s275 + $0xf0] sm:$0xf] %v396
                %v398 = vld [vmem:[%s274 + $0x1b4] sm:$0xf]
                %399 = vst [vmem:[%s275 + $0xf4] sm:$0xf] %v398
                %v400 = vld [vmem:[%s274 + $0x1b8] sm:$0xf]
                %401 = vst [vmem:[%s275 + $0xf8] sm:$0xf] %v400
                %v402 = vld [vmem:[%s274 + $0x1bc] sm:$0xf]
                %403 = vst [vmem:[%s275 + $0xfc] sm:$0xf] %v402
              $region82: #{tpu_custom_call.1} parent=76 // loop_footer
                %s273 = sadd.s32 1, %s269
              $region83: #{tpu_custom_call.1} parent=76 // loop_footer_branch
                %268 = sbr.rel target = $region79
              $region84: #{tpu_custom_call.1} parent=76 // loop_exit
                _
            $region77: #{tpu_custom_call.1} parent=68 // pred_fallthru
              _
          $region69: #{tpu_custom_call.1} parent=64 // pred_fallthru
            _
          %551 = vnop
        $region65: #{tpu_custom_call.1} parent=19 // pred_fallthru
          _
        // Predicated region
        $region103: #{tpu_custom_call.1} parent=19 // pred_check
          %p552 = pneg %p110
        $region104: #{tpu_custom_call.1} parent=19 // pred_check_branch
          %554 = sbr.rel (%p552) target = $region106
        $region105: #{tpu_custom_call.1} parent=19 // pred_region
          %s555 = sand.u32 %s100, 1
          %s556 = sand.u32 %s100, 1
          %s557 = smul.addr %s556, 256
          %s558 = scalar_lea.vmem [#allocation7], %s557
          %s559 = smul.u32 16, %s22
          %s560 = smul.addr %s20, 128
          %s561 = sadd.s32 %s559, %s560
          %s562 = smul.addr %s561, 4
          %s563 = scalar_lea.vmem %s2, %s562
          // Predicated region
          $region107: #{tpu_custom_call.1} parent=105 // pred_check
            _
          $region108: #{tpu_custom_call.1} parent=105 // pred_check_branch
            %565 = sbr.rel (0) target = $region110
          $region109: #{tpu_custom_call.1} parent=105 // pred_region
            // Predicated region
            $region111: #{tpu_custom_call.1} parent=109 // pred_check
              _
            $region112: #{tpu_custom_call.1} parent=109 // pred_check_branch
              %567 = sbr.rel target = $region114
            $region113: #{tpu_custom_call.1} parent=109 // pred_region
              // Predicated region
              $region126: #{tpu_custom_call.1} parent=113 // pred_check
                _
              $region127: #{tpu_custom_call.1} parent=113 // pred_check_branch
                %708 = sbr.rel (0) target = $region129
              $region128: #{tpu_custom_call.1} parent=113 // pred_region
                loop: start=0, step=1, limit=1
                $region130: #{tpu_custom_call.1} parent=128 // loop_pre_header
                  _
                $region131: #{tpu_custom_call.1} parent=128 // loop_header
                  %s710 = sphi 0, %s714
                  %p711 = scmp.ge.s32.totalorder %s710, 1
                  %s715 = sphi %s563, %s563
                  %s716 = sphi %s558, %s558
                $region132: #{tpu_custom_call.1} parent=128 // loop_header_branch
                  %713 = sbr.rel (%p711) target = $region136
                $region133: #{tpu_custom_call.1} parent=128 // loop_body
                  _
                $region134: #{tpu_custom_call.1} parent=128 // loop_footer
                  %s714 = sadd.s32 1, %s710
                $region135: #{tpu_custom_call.1} parent=128 // loop_footer_branch
                  %709 = sbr.rel target = $region131
                $region136: #{tpu_custom_call.1} parent=128 // loop_exit
                  _
                loop: start=0, step=1, limit=1
                $region137: #{tpu_custom_call.1} parent=128 // loop_pre_header
                  _
                $region138: #{tpu_custom_call.1} parent=128 // loop_header
                  %s719 = sphi 0, %s723
                  %p720 = scmp.ge.s32.totalorder %s719, 1
                  %s724 = sphi %s563, %s563
                  %s725 = sphi %s558, %s558
                $region139: #{tpu_custom_call.1} parent=128 // loop_header_branch
                  %722 = sbr.rel (%p720) target = $region143
                $region140: #{tpu_custom_call.1} parent=128 // loop_body
                  %v726 = vld [vmem:[%s724] sm:$0xf]
                  %727 = vst [vmem:[%s725] sm:$0xf] %v726
                  %v728 = vld [vmem:[%s724 + $0x4] sm:$0xf]
                  %729 = vst [vmem:[%s725 + $0x4] sm:$0xf] %v728
                  %v730 = vld [vmem:[%s724 + $0x8] sm:$0xf]
                  %731 = vst [vmem:[%s725 + $0x8] sm:$0xf] %v730
                  %v732 = vld [vmem:[%s724 + $0xc] sm:$0xf]
                  %733 = vst [vmem:[%s725 + $0xc] sm:$0xf] %v732
                  %v734 = vld [vmem:[%s724 + $0x10] sm:$0xf]
                  %735 = vst [vmem:[%s725 + $0x10] sm:$0xf] %v734
                  %v736 = vld [vmem:[%s724 + $0x14] sm:$0xf]
                  %737 = vst [vmem:[%s725 + $0x14] sm:$0xf] %v736
                  %v738 = vld [vmem:[%s724 + $0x18] sm:$0xf]
                  %739 = vst [vmem:[%s725 + $0x18] sm:$0xf] %v738
                  %v740 = vld [vmem:[%s724 + $0x1c] sm:$0xf]
                  %741 = vst [vmem:[%s725 + $0x1c] sm:$0xf] %v740
                  %v742 = vld [vmem:[%s724 + $0x20] sm:$0xf]
                  %743 = vst [vmem:[%s725 + $0x20] sm:$0xf] %v742
                  %v744 = vld [vmem:[%s724 + $0x24] sm:$0xf]
                  %745 = vst [vmem:[%s725 + $0x24] sm:$0xf] %v744
                  %v746 = vld [vmem:[%s724 + $0x28] sm:$0xf]
                  %747 = vst [vmem:[%s725 + $0x28] sm:$0xf] %v746
                  %v748 = vld [vmem:[%s724 + $0x2c] sm:$0xf]
                  %749 = vst [vmem:[%s725 + $0x2c] sm:$0xf] %v748
                  %v750 = vld [vmem:[%s724 + $0x30] sm:$0xf]
                  %751 = vst [vmem:[%s725 + $0x30] sm:$0xf] %v750
                  %v752 = vld [vmem:[%s724 + $0x34] sm:$0xf]
                  %753 = vst [vmem:[%s725 + $0x34] sm:$0xf] %v752
                  %v754 = vld [vmem:[%s724 + $0x38] sm:$0xf]
                  %755 = vst [vmem:[%s725 + $0x38] sm:$0xf] %v754
                  %v756 = vld [vmem:[%s724 + $0x3c] sm:$0xf]
                  %757 = vst [vmem:[%s725 + $0x3c] sm:$0xf] %v756
                  %v758 = vld [vmem:[%s724 + $0x80] sm:$0xf]
                  %759 = vst [vmem:[%s725 + $0x40] sm:$0xf] %v758
                  %v760 = vld [vmem:[%s724 + $0x84] sm:$0xf]
                  %761 = vst [vmem:[%s725 + $0x44] sm:$0xf] %v760
                  %v762 = vld [vmem:[%s724 + $0x88] sm:$0xf]
                  %763 = vst [vmem:[%s725 + $0x48] sm:$0xf] %v762
                  %v764 = vld [vmem:[%s724 + $0x8c] sm:$0xf]
                  %765 = vst [vmem:[%s725 + $0x4c] sm:$0xf] %v764
                  %v766 = vld [vmem:[%s724 + $0x90] sm:$0xf]
                  %767 = vst [vmem:[%s725 + $0x50] sm:$0xf] %v766
                  %v768 = vld [vmem:[%s724 + $0x94] sm:$0xf]
                  %769 = vst [vmem:[%s725 + $0x54] sm:$0xf] %v768
                  %v770 = vld [vmem:[%s724 + $0x98] sm:$0xf]
                  %771 = vst [vmem:[%s725 + $0x58] sm:$0xf] %v770
                  %v772 = vld [vmem:[%s724 + $0x9c] sm:$0xf]
                  %773 = vst [vmem:[%s725 + $0x5c] sm:$0xf] %v772
                  %v774 = vld [vmem:[%s724 + $0xa0] sm:$0xf]
                  %775 = vst [vmem:[%s725 + $0x60] sm:$0xf] %v774
                  %v776 = vld [vmem:[%s724 + $0xa4] sm:$0xf]
                  %777 = vst [vmem:[%s725 + $0x64] sm:$0xf] %v776
                  %v778 = vld [vmem:[%s724 + $0xa8] sm:$0xf]
                  %779 = vst [vmem:[%s725 + $0x68] sm:$0xf] %v778
                  %v780 = vld [vmem:[%s724 + $0xac] sm:$0xf]
                  %781 = vst [vmem:[%s725 + $0x6c] sm:$0xf] %v780
                  %v782 = vld [vmem:[%s724 + $0xb0] sm:$0xf]
                  %783 = vst [vmem:[%s725 + $0x70] sm:$0xf] %v782
                  %v784 = vld [vmem:[%s724 + $0xb4] sm:$0xf]
                  %785 = vst [vmem:[%s725 + $0x74] sm:$0xf] %v784
                  %v786 = vld [vmem:[%s724 + $0xb8] sm:$0xf]
                  %787 = vst [vmem:[%s725 + $0x78] sm:$0xf] %v786
                  %v788 = vld [vmem:[%s724 + $0xbc] sm:$0xf]
                  %789 = vst [vmem:[%s725 + $0x7c] sm:$0xf] %v788
                  %v790 = vld [vmem:[%s724 + $0x100] sm:$0xf]
                  %791 = vst [vmem:[%s725 + $0x80] sm:$0xf] %v790
                  %v792 = vld [vmem:[%s724 + $0x104] sm:$0xf]
                  %793 = vst [vmem:[%s725 + $0x84] sm:$0xf] %v792
                  %v794 = vld [vmem:[%s724 + $0x108] sm:$0xf]
                  %795 = vst [vmem:[%s725 + $0x88] sm:$0xf] %v794
                  %v796 = vld [vmem:[%s724 + $0x10c] sm:$0xf]
                  %797 = vst [vmem:[%s725 + $0x8c] sm:$0xf] %v796
                  %v798 = vld [vmem:[%s724 + $0x110] sm:$0xf]
                  %799 = vst [vmem:[%s725 + $0x90] sm:$0xf] %v798
                  %v800 = vld [vmem:[%s724 + $0x114] sm:$0xf]
                  %801 = vst [vmem:[%s725 + $0x94] sm:$0xf] %v800
                  %v802 = vld [vmem:[%s724 + $0x118] sm:$0xf]
                  %803 = vst [vmem:[%s725 + $0x98] sm:$0xf] %v802
                  %v804 = vld [vmem:[%s724 + $0x11c] sm:$0xf]
                  %805 = vst [vmem:[%s725 + $0x9c] sm:$0xf] %v804
                  %v806 = vld [vmem:[%s724 + $0x120] sm:$0xf]
                  %807 = vst [vmem:[%s725 + $0xa0] sm:$0xf] %v806
                  %v808 = vld [vmem:[%s724 + $0x124] sm:$0xf]
                  %809 = vst [vmem:[%s725 + $0xa4] sm:$0xf] %v808
                  %v810 = vld [vmem:[%s724 + $0x128] sm:$0xf]
                  %811 = vst [vmem:[%s725 + $0xa8] sm:$0xf] %v810
                  %v812 = vld [vmem:[%s724 + $0x12c] sm:$0xf]
                  %813 = vst [vmem:[%s725 + $0xac] sm:$0xf] %v812
                  %v814 = vld [vmem:[%s724 + $0x130] sm:$0xf]
                  %815 = vst [vmem:[%s725 + $0xb0] sm:$0xf] %v814
                  %v816 = vld [vmem:[%s724 + $0x134] sm:$0xf]
                  %817 = vst [vmem:[%s725 + $0xb4] sm:$0xf] %v816
                  %v818 = vld [vmem:[%s724 + $0x138] sm:$0xf]
                  %819 = vst [vmem:[%s725 + $0xb8] sm:$0xf] %v818
                  %v820 = vld [vmem:[%s724 + $0x13c] sm:$0xf]
                  %821 = vst [vmem:[%s725 + $0xbc] sm:$0xf] %v820
                  %v822 = vld [vmem:[%s724 + $0x180] sm:$0xf]
                  %823 = vst [vmem:[%s725 + $0xc0] sm:$0xf] %v822
                  %v824 = vld [vmem:[%s724 + $0x184] sm:$0xf]
                  %825 = vst [vmem:[%s725 + $0xc4] sm:$0xf] %v824
                  %v826 = vld [vmem:[%s724 + $0x188] sm:$0xf]
                  %827 = vst [vmem:[%s725 + $0xc8] sm:$0xf] %v826
                  %v828 = vld [vmem:[%s724 + $0x18c] sm:$0xf]
                  %829 = vst [vmem:[%s725 + $0xcc] sm:$0xf] %v828
                  %v830 = vld [vmem:[%s724 + $0x190] sm:$0xf]
                  %831 = vst [vmem:[%s725 + $0xd0] sm:$0xf] %v830
                  %v832 = vld [vmem:[%s724 + $0x194] sm:$0xf]
                  %833 = vst [vmem:[%s725 + $0xd4] sm:$0xf] %v832
                  %v834 = vld [vmem:[%s724 + $0x198] sm:$0xf]
                  %835 = vst [vmem:[%s725 + $0xd8] sm:$0xf] %v834
                  %v836 = vld [vmem:[%s724 + $0x19c] sm:$0xf]
                  %837 = vst [vmem:[%s725 + $0xdc] sm:$0xf] %v836
                  %v838 = vld [vmem:[%s724 + $0x1a0] sm:$0xf]
                  %839 = vst [vmem:[%s725 + $0xe0] sm:$0xf] %v838
                  %v840 = vld [vmem:[%s724 + $0x1a4] sm:$0xf]
                  %841 = vst [vmem:[%s725 + $0xe4] sm:$0xf] %v840
                  %v842 = vld [vmem:[%s724 + $0x1a8] sm:$0xf]
                  %843 = vst [vmem:[%s725 + $0xe8] sm:$0xf] %v842
                  %v844 = vld [vmem:[%s724 + $0x1ac] sm:$0xf]
                  %845 = vst [vmem:[%s725 + $0xec] sm:$0xf] %v844
                  %v846 = vld [vmem:[%s724 + $0x1b0] sm:$0xf]
                  %847 = vst [vmem:[%s725 + $0xf0] sm:$0xf] %v846
                  %v848 = vld [vmem:[%s724 + $0x1b4] sm:$0xf]
                  %849 = vst [vmem:[%s725 + $0xf4] sm:$0xf] %v848
                  %v850 = vld [vmem:[%s724 + $0x1b8] sm:$0xf]
                  %851 = vst [vmem:[%s725 + $0xf8] sm:$0xf] %v850
                  %v852 = vld [vmem:[%s724 + $0x1bc] sm:$0xf]
                  %853 = vst [vmem:[%s725 + $0xfc] sm:$0xf] %v852
                $region141: #{tpu_custom_call.1} parent=128 // loop_footer
                  %s723 = sadd.s32 1, %s719
                $region142: #{tpu_custom_call.1} parent=128 // loop_footer_branch
                  %718 = sbr.rel target = $region138
                $region143: #{tpu_custom_call.1} parent=128 // loop_exit
                  _
              $region129: #{tpu_custom_call.1} parent=113 // pred_fallthru
                _
            $region114: #{tpu_custom_call.1} parent=109 // pred_fallthru
              _
            // Predicated region
            $region115: #{tpu_custom_call.1} parent=109 // pred_check
              _
            $region116: #{tpu_custom_call.1} parent=109 // pred_check_branch
              %569 = sbr.rel (0) target = $region118
            $region117: #{tpu_custom_call.1} parent=109 // pred_region
              loop: start=0, step=1, limit=1
              $region119: #{tpu_custom_call.1} parent=117 // loop_pre_header
                _
              $region120: #{tpu_custom_call.1} parent=117 // loop_header
                %s572 = sphi 0, %s576
                %p573 = scmp.ge.s32.totalorder %s572, 1
                %s577 = sphi %s563, %s563
                %s578 = sphi %s558, %s558
              $region121: #{tpu_custom_call.1} parent=117 // loop_header_branch
                %575 = sbr.rel (%p573) target = $region125
              $region122: #{tpu_custom_call.1} parent=117 // loop_body
                %v579 = vld [vmem:[%s577] sm:$0xf]
                %580 = vst [vmem:[%s578] sm:$0xf] %v579
                %v581 = vld [vmem:[%s577 + $0x4] sm:$0xf]
                %582 = vst [vmem:[%s578 + $0x4] sm:$0xf] %v581
                %v583 = vld [vmem:[%s577 + $0x8] sm:$0xf]
                %584 = vst [vmem:[%s578 + $0x8] sm:$0xf] %v583
                %v585 = vld [vmem:[%s577 + $0xc] sm:$0xf]
                %586 = vst [vmem:[%s578 + $0xc] sm:$0xf] %v585
                %v587 = vld [vmem:[%s577 + $0x10] sm:$0xf]
                %588 = vst [vmem:[%s578 + $0x10] sm:$0xf] %v587
                %v589 = vld [vmem:[%s577 + $0x14] sm:$0xf]
                %590 = vst [vmem:[%s578 + $0x14] sm:$0xf] %v589
                %v591 = vld [vmem:[%s577 + $0x18] sm:$0xf]
                %592 = vst [vmem:[%s578 + $0x18] sm:$0xf] %v591
                %v593 = vld [vmem:[%s577 + $0x1c] sm:$0xf]
                %594 = vst [vmem:[%s578 + $0x1c] sm:$0xf] %v593
                %v595 = vld [vmem:[%s577 + $0x20] sm:$0xf]
                %596 = vst [vmem:[%s578 + $0x20] sm:$0xf] %v595
                %v597 = vld [vmem:[%s577 + $0x24] sm:$0xf]
                %598 = vst [vmem:[%s578 + $0x24] sm:$0xf] %v597
                %v599 = vld [vmem:[%s577 + $0x28] sm:$0xf]
                %600 = vst [vmem:[%s578 + $0x28] sm:$0xf] %v599
                %v601 = vld [vmem:[%s577 + $0x2c] sm:$0xf]
                %602 = vst [vmem:[%s578 + $0x2c] sm:$0xf] %v601
                %v603 = vld [vmem:[%s577 + $0x30] sm:$0xf]
                %604 = vst [vmem:[%s578 + $0x30] sm:$0xf] %v603
                %v605 = vld [vmem:[%s577 + $0x34] sm:$0xf]
                %606 = vst [vmem:[%s578 + $0x34] sm:$0xf] %v605
                %v607 = vld [vmem:[%s577 + $0x38] sm:$0xf]
                %608 = vst [vmem:[%s578 + $0x38] sm:$0xf] %v607
                %v609 = vld [vmem:[%s577 + $0x3c] sm:$0xf]
                %610 = vst [vmem:[%s578 + $0x3c] sm:$0xf] %v609
                %v611 = vld [vmem:[%s577 + $0x80] sm:$0xf]
                %612 = vst [vmem:[%s578 + $0x40] sm:$0xf] %v611
                %v613 = vld [vmem:[%s577 + $0x84] sm:$0xf]
                %614 = vst [vmem:[%s578 + $0x44] sm:$0xf] %v613
                %v615 = vld [vmem:[%s577 + $0x88] sm:$0xf]
                %616 = vst [vmem:[%s578 + $0x48] sm:$0xf] %v615
                %v617 = vld [vmem:[%s577 + $0x8c] sm:$0xf]
                %618 = vst [vmem:[%s578 + $0x4c] sm:$0xf] %v617
                %v619 = vld [vmem:[%s577 + $0x90] sm:$0xf]
                %620 = vst [vmem:[%s578 + $0x50] sm:$0xf] %v619
                %v621 = vld [vmem:[%s577 + $0x94] sm:$0xf]
                %622 = vst [vmem:[%s578 + $0x54] sm:$0xf] %v621
                %v623 = vld [vmem:[%s577 + $0x98] sm:$0xf]
                %624 = vst [vmem:[%s578 + $0x58] sm:$0xf] %v623
                %v625 = vld [vmem:[%s577 + $0x9c] sm:$0xf]
                %626 = vst [vmem:[%s578 + $0x5c] sm:$0xf] %v625
                %v627 = vld [vmem:[%s577 + $0xa0] sm:$0xf]
                %628 = vst [vmem:[%s578 + $0x60] sm:$0xf] %v627
                %v629 = vld [vmem:[%s577 + $0xa4] sm:$0xf]
                %630 = vst [vmem:[%s578 + $0x64] sm:$0xf] %v629
                %v631 = vld [vmem:[%s577 + $0xa8] sm:$0xf]
                %632 = vst [vmem:[%s578 + $0x68] sm:$0xf] %v631
                %v633 = vld [vmem:[%s577 + $0xac] sm:$0xf]
                %634 = vst [vmem:[%s578 + $0x6c] sm:$0xf] %v633
                %v635 = vld [vmem:[%s577 + $0xb0] sm:$0xf]
                %636 = vst [vmem:[%s578 + $0x70] sm:$0xf] %v635
                %v637 = vld [vmem:[%s577 + $0xb4] sm:$0xf]
                %638 = vst [vmem:[%s578 + $0x74] sm:$0xf] %v637
                %v639 = vld [vmem:[%s577 + $0xb8] sm:$0xf]
                %640 = vst [vmem:[%s578 + $0x78] sm:$0xf] %v639
                %v641 = vld [vmem:[%s577 + $0xbc] sm:$0xf]
                %642 = vst [vmem:[%s578 + $0x7c] sm:$0xf] %v641
                %v643 = vld [vmem:[%s577 + $0x100] sm:$0xf]
                %644 = vst [vmem:[%s578 + $0x80] sm:$0xf] %v643
                %v645 = vld [vmem:[%s577 + $0x104] sm:$0xf]
                %646 = vst [vmem:[%s578 + $0x84] sm:$0xf] %v645
                %v647 = vld [vmem:[%s577 + $0x108] sm:$0xf]
                %648 = vst [vmem:[%s578 + $0x88] sm:$0xf] %v647
                %v649 = vld [vmem:[%s577 + $0x10c] sm:$0xf]
                %650 = vst [vmem:[%s578 + $0x8c] sm:$0xf] %v649
                %v651 = vld [vmem:[%s577 + $0x110] sm:$0xf]
                %652 = vst [vmem:[%s578 + $0x90] sm:$0xf] %v651
                %v653 = vld [vmem:[%s577 + $0x114] sm:$0xf]
                %654 = vst [vmem:[%s578 + $0x94] sm:$0xf] %v653
                %v655 = vld [vmem:[%s577 + $0x118] sm:$0xf]
                %656 = vst [vmem:[%s578 + $0x98] sm:$0xf] %v655
                %v657 = vld [vmem:[%s577 + $0x11c] sm:$0xf]
                %658 = vst [vmem:[%s578 + $0x9c] sm:$0xf] %v657
                %v659 = vld [vmem:[%s577 + $0x120] sm:$0xf]
                %660 = vst [vmem:[%s578 + $0xa0] sm:$0xf] %v659
                %v661 = vld [vmem:[%s577 + $0x124] sm:$0xf]
                %662 = vst [vmem:[%s578 + $0xa4] sm:$0xf] %v661
                %v663 = vld [vmem:[%s577 + $0x128] sm:$0xf]
                %664 = vst [vmem:[%s578 + $0xa8] sm:$0xf] %v663
                %v665 = vld [vmem:[%s577 + $0x12c] sm:$0xf]
                %666 = vst [vmem:[%s578 + $0xac] sm:$0xf] %v665
                %v667 = vld [vmem:[%s577 + $0x130] sm:$0xf]
                %668 = vst [vmem:[%s578 + $0xb0] sm:$0xf] %v667
                %v669 = vld [vmem:[%s577 + $0x134] sm:$0xf]
                %670 = vst [vmem:[%s578 + $0xb4] sm:$0xf] %v669
                %v671 = vld [vmem:[%s577 + $0x138] sm:$0xf]
                %672 = vst [vmem:[%s578 + $0xb8] sm:$0xf] %v671
                %v673 = vld [vmem:[%s577 + $0x13c] sm:$0xf]
                %674 = vst [vmem:[%s578 + $0xbc] sm:$0xf] %v673
                %v675 = vld [vmem:[%s577 + $0x180] sm:$0xf]
                %676 = vst [vmem:[%s578 + $0xc0] sm:$0xf] %v675
                %v677 = vld [vmem:[%s577 + $0x184] sm:$0xf]
                %678 = vst [vmem:[%s578 + $0xc4] sm:$0xf] %v677
                %v679 = vld [vmem:[%s577 + $0x188] sm:$0xf]
                %680 = vst [vmem:[%s578 + $0xc8] sm:$0xf] %v679
                %v681 = vld [vmem:[%s577 + $0x18c] sm:$0xf]
                %682 = vst [vmem:[%s578 + $0xcc] sm:$0xf] %v681
                %v683 = vld [vmem:[%s577 + $0x190] sm:$0xf]
                %684 = vst [vmem:[%s578 + $0xd0] sm:$0xf] %v683
                %v685 = vld [vmem:[%s577 + $0x194] sm:$0xf]
                %686 = vst [vmem:[%s578 + $0xd4] sm:$0xf] %v685
                %v687 = vld [vmem:[%s577 + $0x198] sm:$0xf]
                %688 = vst [vmem:[%s578 + $0xd8] sm:$0xf] %v687
                %v689 = vld [vmem:[%s577 + $0x19c] sm:$0xf]
                %690 = vst [vmem:[%s578 + $0xdc] sm:$0xf] %v689
                %v691 = vld [vmem:[%s577 + $0x1a0] sm:$0xf]
                %692 = vst [vmem:[%s578 + $0xe0] sm:$0xf] %v691
                %v693 = vld [vmem:[%s577 + $0x1a4] sm:$0xf]
                %694 = vst [vmem:[%s578 + $0xe4] sm:$0xf] %v693
                %v695 = vld [vmem:[%s577 + $0x1a8] sm:$0xf]
                %696 = vst [vmem:[%s578 + $0xe8] sm:$0xf] %v695
                %v697 = vld [vmem:[%s577 + $0x1ac] sm:$0xf]
                %698 = vst [vmem:[%s578 + $0xec] sm:$0xf] %v697
                %v699 = vld [vmem:[%s577 + $0x1b0] sm:$0xf]
                %700 = vst [vmem:[%s578 + $0xf0] sm:$0xf] %v699
                %v701 = vld [vmem:[%s577 + $0x1b4] sm:$0xf]
                %702 = vst [vmem:[%s578 + $0xf4] sm:$0xf] %v701
                %v703 = vld [vmem:[%s577 + $0x1b8] sm:$0xf]
                %704 = vst [vmem:[%s578 + $0xf8] sm:$0xf] %v703
                %v705 = vld [vmem:[%s577 + $0x1bc] sm:$0xf]
                %706 = vst [vmem:[%s578 + $0xfc] sm:$0xf] %v705
              $region123: #{tpu_custom_call.1} parent=117 // loop_footer
                %s576 = sadd.s32 1, %s572
              $region124: #{tpu_custom_call.1} parent=117 // loop_footer_branch
                %571 = sbr.rel target = $region120
              $region125: #{tpu_custom_call.1} parent=117 // loop_exit
                _
            $region118: #{tpu_custom_call.1} parent=109 // pred_fallthru
              _
          $region110: #{tpu_custom_call.1} parent=105 // pred_fallthru
            _
          %854 = vnop
        $region106: #{tpu_custom_call.1} parent=19 // pred_fallthru
          _
      $region20: #{tpu_custom_call.1} parent=5 // pred_fallthru
        _
      %p855 = scmp.le.s32.totalorder 1, %s13
      %p856 = scmp.lt.s32.totalorder %s13, 9
      %p857 = pnand %p855, %p856
      %p858 = pneg %p857
      // Predicated region
      $region144: #{tpu_custom_call.1} parent=5 // pred_check
        _
      $region145: #{tpu_custom_call.1} parent=5 // pred_check_branch
        %860 = sbr.rel (%p857) target = $region147
      $region146: #{tpu_custom_call.1} parent=5 // pred_region
        %s861 = ssub.s32 %s13, 1
        %s862 = sand.u32 %s47, 1
        %s863 = sand.u32 %s47, 1
        %s864 = smul.addr %s863, 16
        %s865 = scalar_lea.vmem [#allocation5], %s864
        // Predicated region
        $region148: #{tpu_custom_call.1} parent=146 // pred_check
          %p866 = pneg %p60
        $region149: #{tpu_custom_call.1} parent=146 // pred_check_branch
          %868 = sbr.rel (%p866) target = $region151
        $region150: #{tpu_custom_call.1} parent=146 // pred_region
          _
        $region151: #{tpu_custom_call.1} parent=146 // pred_fallthru
          _
        %s869 = sand.u32 %s75, 1
        %s870 = sand.u32 %s75, 1
        %s871 = smul.addr %s870, 256
        %s872 = scalar_lea.vmem [#allocation6], %s871
        // Predicated region
        $region152: #{tpu_custom_call.1} parent=146 // pred_check
          %p873 = pneg %p88
        $region153: #{tpu_custom_call.1} parent=146 // pred_check_branch
          %875 = sbr.rel (%p873) target = $region155
        $region154: #{tpu_custom_call.1} parent=146 // pred_region
          _
        $region155: #{tpu_custom_call.1} parent=146 // pred_fallthru
          _
        %s876 = sand.u32 %s103, 1
        %s877 = sand.u32 %s103, 1
        %s878 = smul.addr %s877, 256
        %s879 = scalar_lea.vmem [#allocation7], %s878
        // Predicated region
        $region156: #{tpu_custom_call.1} parent=146 // pred_check
          %p880 = pneg %p116
        $region157: #{tpu_custom_call.1} parent=146 // pred_check_branch
          %882 = sbr.rel (%p880) target = $region159
        $region158: #{tpu_custom_call.1} parent=146 // pred_region
          _
        $region159: #{tpu_custom_call.1} parent=146 // pred_fallthru
          _
        %s883 = sand.u32 %s47, 1
        %s884 = sand.u32 %s47, 1
        %s885 = smul.addr %s884, 16
        %s886 = scalar_lea.vmem [#allocation5], %s885
        %p887 = pneg %p60
        %p888 = pneg %p57
        %s889 = sand.u32 %s75, 1
        %s890 = sand.u32 %s75, 1
        %s891 = smul.addr %s890, 256
        %s892 = scalar_lea.vmem [#allocation6], %s891
        %p893 = pneg %p88
        %p894 = pneg %p85
        %s895 = sand.u32 %s103, 1
        %s896 = sand.u32 %s103, 1
        %s897 = smul.addr %s896, 256
        %s898 = scalar_lea.vmem [#allocation7], %s897
        %p899 = pneg %p116
        %p900 = pneg %p113
        %p901 = pneg %p137
        %p902 = pneg %p134
        %p903 = pneg %p165
        %p904 = pneg %p162
        %s905 = sand.u32 %s152, 1
        %s906 = scalar_lea.sflag [#allocation9], %s905
        %s907 = sand.u32 %s152, 1
        %s908 = smul.addr %s907, 8
        %s909 = scalar_lea.vmem [#allocation8], %s908
        %s910 = smul.u32 16, %s25
        %s911 = smul.u32 16, %s25
        %p913 = scmp.eq.s32.totalorder %s25, 0
        // Predicated region
        $region160: #{tpu_custom_call.1} parent=146 // pred_check
          %p914 = pneg %p913
        $region161: #{tpu_custom_call.1} parent=146 // pred_check_branch
          %916 = sbr.rel (%p914) target = $region163
        $region162: #{tpu_custom_call.1} parent=146 // pred_region
          %vm917 = vcmask 7168
          %918 = vst.msk [vmem:[#allocation2] sm:$0xff] %vm917, -inf
          %919 = vst.msk [vmem:[#allocation2 + $0x8] sm:$0xff] %vm917, -inf
          %920 = vst.msk [vmem:[#allocation2 + $0x10] sm:$0xff] %vm917, -inf
          %921 = vst.msk [vmem:[#allocation2 + $0x18] sm:$0xff] %vm917, -inf
          %922 = vst.msk [vmem:[#allocation3] sm:$0xff] %vm917, 0.0
          %923 = vst.msk [vmem:[#allocation3 + $0x8] sm:$0xff] %vm917, 0.0
          %924 = vst.msk [vmem:[#allocation3 + $0x10] sm:$0xff] %vm917, 0.0
          %925 = vst.msk [vmem:[#allocation3 + $0x18] sm:$0xff] %vm917, 0.0
          %vm926 = vcmask 130048
          %927 = vst.msk [vmem:[#allocation4] sm:$0xff] %vm926, 0.0
          %928 = vst.msk [vmem:[#allocation4 + $0x8] sm:$0xff] %vm926, 0.0
          %929 = vst.msk [vmem:[#allocation4 + $0x10] sm:$0xff] %vm926, 0.0
          %930 = vst.msk [vmem:[#allocation4 + $0x18] sm:$0xff] %vm926, 0.0
        $region163: #{tpu_custom_call.1} parent=146 // pred_fallthru
          _
        %v931 = vld [vmem:[%s865] sm:$0xf]
        %v932 = vld [vmem:[%s865 + $0x4] sm:$0xf]
        %v933 = vld [vmem:[%s865 + $0x8] sm:$0xf]
        %v934 = vld [vmem:[%s865 + $0xc] sm:$0xf]
        %v935 = vld [vmem:[%s872] sm:$0xf]
        %v936 = vld [vmem:[%s872 + $0x4] sm:$0xf]
        %v937 = vld [vmem:[%s872 + $0x8] sm:$0xf]
        %v938 = vld [vmem:[%s872 + $0xc] sm:$0xf]
        %v939 = vld [vmem:[%s872 + $0x10] sm:$0xf]
        %v940 = vld [vmem:[%s872 + $0x14] sm:$0xf]
        %v941 = vld [vmem:[%s872 + $0x18] sm:$0xf]
        %v942 = vld [vmem:[%s872 + $0x1c] sm:$0xf]
        %v943 = vld [vmem:[%s872 + $0x20] sm:$0xf]
        %v944 = vld [vmem:[%s872 + $0x24] sm:$0xf]
        %v945 = vld [vmem:[%s872 + $0x28] sm:$0xf]
        %v946 = vld [vmem:[%s872 + $0x2c] sm:$0xf]
        %v947 = vld [vmem:[%s872 + $0x30] sm:$0xf]
        %v948 = vld [vmem:[%s872 + $0x34] sm:$0xf]
        %v949 = vld [vmem:[%s872 + $0x38] sm:$0xf]
        %v950 = vld [vmem:[%s872 + $0x3c] sm:$0xf]
        %v951 = vld [vmem:[%s872 + $0x40] sm:$0xf]
        %v952 = vld [vmem:[%s872 + $0x44] sm:$0xf]
        %v953 = vld [vmem:[%s872 + $0x48] sm:$0xf]
        %v954 = vld [vmem:[%s872 + $0x4c] sm:$0xf]
        %v955 = vld [vmem:[%s872 + $0x50] sm:$0xf]
        %v956 = vld [vmem:[%s872 + $0x54] sm:$0xf]
        %v957 = vld [vmem:[%s872 + $0x58] sm:$0xf]
        %v958 = vld [vmem:[%s872 + $0x5c] sm:$0xf]
        %v959 = vld [vmem:[%s872 + $0x60] sm:$0xf]
        %v960 = vld [vmem:[%s872 + $0x64] sm:$0xf]
        %v961 = vld [vmem:[%s872 + $0x68] sm:$0xf]
        %v962 = vld [vmem:[%s872 + $0x6c] sm:$0xf]
        %v963 = vld [vmem:[%s872 + $0x70] sm:$0xf]
        %v964 = vld [vmem:[%s872 + $0x74] sm:$0xf]
        %v965 = vld [vmem:[%s872 + $0x78] sm:$0xf]
        %v966 = vld [vmem:[%s872 + $0x7c] sm:$0xf]
        %v967 = vld [vmem:[%s872 + $0x80] sm:$0xf]
        %v968 = vld [vmem:[%s872 + $0x84] sm:$0xf]
        %v969 = vld [vmem:[%s872 + $0x88] sm:$0xf]
        %v970 = vld [vmem:[%s872 + $0x8c] sm:$0xf]
        %v971 = vld [vmem:[%s872 + $0x90] sm:$0xf]
        %v972 = vld [vmem:[%s872 + $0x94] sm:$0xf]
        %v973 = vld [vmem:[%s872 + $0x98] sm:$0xf]
        %v974 = vld [vmem:[%s872 + $0x9c] sm:$0xf]
        %v975 = vld [vmem:[%s872 + $0xa0] sm:$0xf]
        %v976 = vld [vmem:[%s872 + $0xa4] sm:$0xf]
        %v977 = vld [vmem:[%s872 + $0xa8] sm:$0xf]
        %v978 = vld [vmem:[%s872 + $0xac] sm:$0xf]
        %v979 = vld [vmem:[%s872 + $0xb0] sm:$0xf]
        %v980 = vld [vmem:[%s872 + $0xb4] sm:$0xf]
        %v981 = vld [vmem:[%s872 + $0xb8] sm:$0xf]
        %v982 = vld [vmem:[%s872 + $0xbc] sm:$0xf]
        %v983 = vld [vmem:[%s872 + $0xc0] sm:$0xf]
        %v984 = vld [vmem:[%s872 + $0xc4] sm:$0xf]
        %v985 = vld [vmem:[%s872 + $0xc8] sm:$0xf]
        %v986 = vld [vmem:[%s872 + $0xcc] sm:$0xf]
        %v987 = vld [vmem:[%s872 + $0xd0] sm:$0xf]
        %v988 = vld [vmem:[%s872 + $0xd4] sm:$0xf]
        %v989 = vld [vmem:[%s872 + $0xd8] sm:$0xf]
        %v990 = vld [vmem:[%s872 + $0xdc] sm:$0xf]
        %v991 = vld [vmem:[%s872 + $0xe0] sm:$0xf]
        %v992 = vld [vmem:[%s872 + $0xe4] sm:$0xf]
        %v993 = vld [vmem:[%s872 + $0xe8] sm:$0xf]
        %v994 = vld [vmem:[%s872 + $0xec] sm:$0xf]
        %v995 = vld [vmem:[%s872 + $0xf0] sm:$0xf]
        %v996 = vld [vmem:[%s872 + $0xf4] sm:$0xf]
        %v997 = vld [vmem:[%s872 + $0xf8] sm:$0xf]
        %v998 = vld [vmem:[%s872 + $0xfc] sm:$0xf]
        %v999 = vld [vmem:[%s879] sm:$0xf]
        %v1000 = vld [vmem:[%s879 + $0x4] sm:$0xf]
        %v1001 = vld [vmem:[%s879 + $0x8] sm:$0xf]
        %v1002 = vld [vmem:[%s879 + $0xc] sm:$0xf]
        %v1003 = vld [vmem:[%s879 + $0x10] sm:$0xf]
        %v1004 = vld [vmem:[%s879 + $0x14] sm:$0xf]
        %v1005 = vld [vmem:[%s879 + $0x18] sm:$0xf]
        %v1006 = vld [vmem:[%s879 + $0x1c] sm:$0xf]
        %v1007 = vld [vmem:[%s879 + $0x20] sm:$0xf]
        %v1008 = vld [vmem:[%s879 + $0x24] sm:$0xf]
        %v1009 = vld [vmem:[%s879 + $0x28] sm:$0xf]
        %v1010 = vld [vmem:[%s879 + $0x2c] sm:$0xf]
        %v1011 = vld [vmem:[%s879 + $0x30] sm:$0xf]
        %v1012 = vld [vmem:[%s879 + $0x34] sm:$0xf]
        %v1013 = vld [vmem:[%s879 + $0x38] sm:$0xf]
        %v1014 = vld [vmem:[%s879 + $0x3c] sm:$0xf]
        %v1015 = vld [vmem:[%s879 + $0x40] sm:$0xf]
        %v1016 = vld [vmem:[%s879 + $0x44] sm:$0xf]
        %v1017 = vld [vmem:[%s879 + $0x48] sm:$0xf]
        %v1018 = vld [vmem:[%s879 + $0x4c] sm:$0xf]
        %v1019 = vld [vmem:[%s879 + $0x50] sm:$0xf]
        %v1020 = vld [vmem:[%s879 + $0x54] sm:$0xf]
        %v1021 = vld [vmem:[%s879 + $0x58] sm:$0xf]
        %v1022 = vld [vmem:[%s879 + $0x5c] sm:$0xf]
        %v1023 = vld [vmem:[%s879 + $0x60] sm:$0xf]
        %v1024 = vld [vmem:[%s879 + $0x64] sm:$0xf]
        %v1025 = vld [vmem:[%s879 + $0x68] sm:$0xf]
        %v1026 = vld [vmem:[%s879 + $0x6c] sm:$0xf]
        %v1027 = vld [vmem:[%s879 + $0x70] sm:$0xf]
        %v1028 = vld [vmem:[%s879 + $0x74] sm:$0xf]
        %v1029 = vld [vmem:[%s879 + $0x78] sm:$0xf]
        %v1030 = vld [vmem:[%s879 + $0x7c] sm:$0xf]
        %v1031 = vld [vmem:[%s879 + $0x80] sm:$0xf]
        %v1032 = vld [vmem:[%s879 + $0x84] sm:$0xf]
        %v1033 = vld [vmem:[%s879 + $0x88] sm:$0xf]
        %v1034 = vld [vmem:[%s879 + $0x8c] sm:$0xf]
        %v1035 = vld [vmem:[%s879 + $0x90] sm:$0xf]
        %v1036 = vld [vmem:[%s879 + $0x94] sm:$0xf]
        %v1037 = vld [vmem:[%s879 + $0x98] sm:$0xf]
        %v1038 = vld [vmem:[%s879 + $0x9c] sm:$0xf]
        %v1039 = vld [vmem:[%s879 + $0xa0] sm:$0xf]
        %v1040 = vld [vmem:[%s879 + $0xa4] sm:$0xf]
        %v1041 = vld [vmem:[%s879 + $0xa8] sm:$0xf]
        %v1042 = vld [vmem:[%s879 + $0xac] sm:$0xf]
        %v1043 = vld [vmem:[%s879 + $0xb0] sm:$0xf]
        %v1044 = vld [vmem:[%s879 + $0xb4] sm:$0xf]
        %v1045 = vld [vmem:[%s879 + $0xb8] sm:$0xf]
        %v1046 = vld [vmem:[%s879 + $0xbc] sm:$0xf]
        %v1047 = vld [vmem:[%s879 + $0xc0] sm:$0xf]
        %v1048 = vld [vmem:[%s879 + $0xc4] sm:$0xf]
        %v1049 = vld [vmem:[%s879 + $0xc8] sm:$0xf]
        %v1050 = vld [vmem:[%s879 + $0xcc] sm:$0xf]
        %v1051 = vld [vmem:[%s879 + $0xd0] sm:$0xf]
        %v1052 = vld [vmem:[%s879 + $0xd4] sm:$0xf]
        %v1053 = vld [vmem:[%s879 + $0xd8] sm:$0xf]
        %v1054 = vld [vmem:[%s879 + $0xdc] sm:$0xf]
        %v1055 = vld [vmem:[%s879 + $0xe0] sm:$0xf]
        %v1056 = vld [vmem:[%s879 + $0xe4] sm:$0xf]
        %v1057 = vld [vmem:[%s879 + $0xe8] sm:$0xf]
        %v1058 = vld [vmem:[%s879 + $0xec] sm:$0xf]
        %v1059 = vld [vmem:[%s879 + $0xf0] sm:$0xf]
        %v1060 = vld [vmem:[%s879 + $0xf4] sm:$0xf]
        %v1061 = vld [vmem:[%s879 + $0xf8] sm:$0xf]
        %v1062 = vld [vmem:[%s879 + $0xfc] sm:$0xf]
        %v1079 = vunpack.c.l.b16 %v935
        %v1080 = vunpack.c.l.b16 %v936
        %v1081 = vunpack.c.l.b16 %v937
        %v1082 = vunpack.c.l.b16 %v938
        %v1083 = vunpack.c.l.b16 %v939
        %v1084 = vunpack.c.l.b16 %v940
        %v1085 = vunpack.c.l.b16 %v941
        %v1086 = vunpack.c.l.b16 %v942
        %v1087 = vunpack.c.l.b16 %v943
        %v1088 = vunpack.c.l.b16 %v944
        %v1089 = vunpack.c.l.b16 %v945
        %v1090 = vunpack.c.l.b16 %v946
        %v1091 = vunpack.c.l.b16 %v947
        %v1092 = vunpack.c.l.b16 %v948
        %v1093 = vunpack.c.l.b16 %v949
        %v1094 = vunpack.c.l.b16 %v950
        %v1095 = vpack.c.b16 %v1080, %v1079
        %v1096 = vpack.c.b16 %v1082, %v1081
        %v1097 = vpack.c.b16 %v1084, %v1083
        %v1098 = vpack.c.b16 %v1086, %v1085
        %v1099 = vpack.c.b16 %v1088, %v1087
        %v1100 = vpack.c.b16 %v1090, %v1089
        %v1101 = vpack.c.b16 %v1092, %v1091
        %v1102 = vpack.c.b16 %v1094, %v1093
        %vm1103 = vcmask 130048
        %v1105 = vsel %vm1103, %v931, 0
        %v1108 = vsel %vm1103, %v1095, 0
        %v1111 = vsel %vm1103, %v1096, 0
        %v1114 = vsel %vm1103, %v1097, 0
        %v1117 = vsel %vm1103, %v1098, 0
        %v1120 = vsel %vm1103, %v1099, 0
        %v1123 = vsel %vm1103, %v1100, 0
        %v1126 = vsel %vm1103, %v1101, 0
        %v1129 = vsel %vm1103, %v1102, 0
        %1131 = vmatprep.subr.bf16.mxu0 0
        %1132 = vmatpush1.bf16.xpose.msra.mxu0 %v1108
        %1133 = vmatprep.subr.bf16.mxu0 0
        %1134 = vmatpush1.bf16.xpose.msra.mxu0 %v1111
        %1135 = vmatprep.subr.bf16.mxu0 0
        %1136 = vmatpush1.bf16.xpose.msra.mxu0 %v1114
        %1137 = vmatprep.subr.bf16.mxu0 0
        %1138 = vmatpush1.bf16.xpose.msra.mxu0 %v1117
        %1139 = vmatprep.subr.bf16.mxu0 0
        %1140 = vmatpush1.bf16.xpose.msra.mxu0 %v1120
        %1141 = vmatprep.subr.bf16.mxu0 0
        %1142 = vmatpush1.bf16.xpose.msra.mxu0 %v1123
        %1143 = vmatprep.subr.bf16.mxu0 0
        %1144 = vmatpush1.bf16.xpose.msra.mxu0 %v1126
        %1145 = vmatprep.subr.bf16.mxu0 0
        %1146 = vmatpush1.bf16.xpose.msra.mxu0 %v1129
        %1147 = vmatprep.subr.bf16.mxu0 0
        %1148 = vmatpush1.bf16.xpose.msra.mxu0 0
        %1149 = vmatprep.subr.bf16.mxu0 0
        %1150 = vmatpush1.bf16.xpose.msra.mxu0 0
        %1151 = vmatprep.subr.bf16.mxu0 0
        %1152 = vmatpush1.bf16.xpose.msra.mxu0 0
        %1153 = vmatprep.subr.bf16.mxu0 0
        %1154 = vmatpush1.bf16.xpose.msra.mxu0 0
        %1155 = vmatprep.subr.bf16.mxu0 0
        %1156 = vmatpush1.bf16.xpose.msra.mxu0 0
        %1157 = vmatprep.subr.bf16.mxu0 0
        %1158 = vmatpush1.bf16.xpose.msra.mxu0 0
        %1159 = vmatprep.subr.bf16.mxu0 0
        %1160 = vmatpush1.bf16.xpose.msra.mxu0 0
        %1161 = vmatprep.subr.bf16.mxu0 0
        %1162 = vmatpush1.bf16.xpose.msra.mxu0 0
        %1163 = vmatprep.mubr.bf16.mxu0 0
        %1164 = vmatmul.mubr.bf16.gmra.mrb[0].mxu0 %v1105
        %v1165 = vpop.f32.mrb[0].mxu0
        %v1166 = vadd.f32 0.0, %v1165
        %v1167 = vpop.f32.mrb[0].mxu0
        %v1168 = vpop.f32.mrb[0].mxu0
        %v1169 = vpop.f32.mrb[0].mxu0
        %1170 = vdwg.mxu0
        %v1187 = vunpack.c.l.b16 %v951
        %v1188 = vunpack.c.l.b16 %v952
        %v1189 = vunpack.c.l.b16 %v953
        %v1190 = vunpack.c.l.b16 %v954
        %v1191 = vunpack.c.l.b16 %v955
        %v1192 = vunpack.c.l.b16 %v956
        %v1193 = vunpack.c.l.b16 %v957
        %v1194 = vunpack.c.l.b16 %v958
        %v1195 = vunpack.c.l.b16 %v959
        %v1196 = vunpack.c.l.b16 %v960
        %v1197 = vunpack.c.l.b16 %v961
        %v1198 = vunpack.c.l.b16 %v962
        %v1199 = vunpack.c.l.b16 %v963
        %v1200 = vunpack.c.l.b16 %v964
        %v1201 = vunpack.c.l.b16 %v965
        %v1202 = vunpack.c.l.b16 %v966
        %v1203 = vpack.c.b16 %v1188, %v1187
        %v1204 = vpack.c.b16 %v1190, %v1189
        %v1205 = vpack.c.b16 %v1192, %v1191
        %v1206 = vpack.c.b16 %v1194, %v1193
        %v1207 = vpack.c.b16 %v1196, %v1195
        %v1208 = vpack.c.b16 %v1198, %v1197
        %v1209 = vpack.c.b16 %v1200, %v1199
        %v1210 = vpack.c.b16 %v1202, %v1201
        %v1212 = vsel %vm1103, %v932, 0
        %v1215 = vsel %vm1103, %v1203, 0
        %v1218 = vsel %vm1103, %v1204, 0
        %v1221 = vsel %vm1103, %v1205, 0
        %v1224 = vsel %vm1103, %v1206, 0
        %v1227 = vsel %vm1103, %v1207, 0
        %v1230 = vsel %vm1103, %v1208, 0
        %v1233 = vsel %vm1103, %v1209, 0
        %v1236 = vsel %vm1103, %v1210, 0
        %1238 = vmatprep.subr.bf16.mxu0 0
        %1239 = vmatpush1.bf16.xpose.msra.mxu0 %v1215
        %1240 = vmatprep.subr.bf16.mxu0 0
        %1241 = vmatpush1.bf16.xpose.msra.mxu0 %v1218
        %1242 = vmatprep.subr.bf16.mxu0 0
        %1243 = vmatpush1.bf16.xpose.msra.mxu0 %v1221
        %1244 = vmatprep.subr.bf16.mxu0 0
        %1245 = vmatpush1.bf16.xpose.msra.mxu0 %v1224
        %1246 = vmatprep.subr.bf16.mxu0 0
        %1247 = vmatpush1.bf16.xpose.msra.mxu0 %v1227
        %1248 = vmatprep.subr.bf16.mxu0 0
        %1249 = vmatpush1.bf16.xpose.msra.mxu0 %v1230
        %1250 = vmatprep.subr.bf16.mxu0 0
        %1251 = vmatpush1.bf16.xpose.msra.mxu0 %v1233
        %1252 = vmatprep.subr.bf16.mxu0 0
        %1253 = vmatpush1.bf16.xpose.msra.mxu0 %v1236
        %1254 = vmatprep.subr.bf16.mxu0 0
        %1255 = vmatpush1.bf16.xpose.msra.mxu0 0
        %1256 = vmatprep.subr.bf16.mxu0 0
        %1257 = vmatpush1.bf16.xpose.msra.mxu0 0
        %1258 = vmatprep.subr.bf16.mxu0 0
        %1259 = vmatpush1.bf16.xpose.msra.mxu0 0
        %1260 = vmatprep.subr.bf16.mxu0 0
        %1261 = vmatpush1.bf16.xpose.msra.mxu0 0
        %1262 = vmatprep.subr.bf16.mxu0 0
        %1263 = vmatpush1.bf16.xpose.msra.mxu0 0
        %1264 = vmatprep.subr.bf16.mxu0 0
        %1265 = vmatpush1.bf16.xpose.msra.mxu0 0
        %1266 = vmatprep.subr.bf16.mxu0 0
        %1267 = vmatpush1.bf16.xpose.msra.mxu0 0
        %1268 = vmatprep.subr.bf16.mxu0 0
        %1269 = vmatpush1.bf16.xpose.msra.mxu0 0
        %1270 = vmatprep.mubr.bf16.mxu0 0
        %1271 = vmatmul.mubr.bf16.gmra.mrb[0].mxu0 %v1212
        %v1272 = vpop.f32.mrb[0].mxu0
        %v1273 = vadd.f32 0.0, %v1272
        %v1274 = vpop.f32.mrb[0].mxu0
        %v1275 = vpop.f32.mrb[0].mxu0
        %v1276 = vpop.f32.mrb[0].mxu0
        %1277 = vdwg.mxu0
        %v1294 = vunpack.c.l.b16 %v967
        %v1295 = vunpack.c.l.b16 %v968
        %v1296 = vunpack.c.l.b16 %v969
        %v1297 = vunpack.c.l.b16 %v970
        %v1298 = vunpack.c.l.b16 %v971
        %v1299 = vunpack.c.l.b16 %v972
        %v1300 = vunpack.c.l.b16 %v973
        %v1301 = vunpack.c.l.b16 %v974
        %v1302 = vunpack.c.l.b16 %v975
        %v1303 = vunpack.c.l.b16 %v976
        %v1304 = vunpack.c.l.b16 %v977
        %v1305 = vunpack.c.l.b16 %v978
        %v1306 = vunpack.c.l.b16 %v979
        %v1307 = vunpack.c.l.b16 %v980
        %v1308 = vunpack.c.l.b16 %v981
        %v1309 = vunpack.c.l.b16 %v982
        %v1310 = vpack.c.b16 %v1295, %v1294
        %v1311 = vpack.c.b16 %v1297, %v1296
        %v1312 = vpack.c.b16 %v1299, %v1298
        %v1313 = vpack.c.b16 %v1301, %v1300
        %v1314 = vpack.c.b16 %v1303, %v1302
        %v1315 = vpack.c.b16 %v1305, %v1304
        %v1316 = vpack.c.b16 %v1307, %v1306
        %v1317 = vpack.c.b16 %v1309, %v1308
        %v1319 = vsel %vm1103, %v933, 0
        %v1322 = vsel %vm1103, %v1310, 0
        %v1325 = vsel %vm1103, %v1311, 0
        %v1328 = vsel %vm1103, %v1312, 0
        %v1331 = vsel %vm1103, %v1313, 0
        %v1334 = vsel %vm1103, %v1314, 0
        %v1337 = vsel %vm1103, %v1315, 0
        %v1340 = vsel %vm1103, %v1316, 0
        %v1343 = vsel %vm1103, %v1317, 0
        %1345 = vmatprep.subr.bf16.mxu0 0
        %1346 = vmatpush1.bf16.xpose.msra.mxu0 %v1322
        %1347 = vmatprep.subr.bf16.mxu0 0
        %1348 = vmatpush1.bf16.xpose.msra.mxu0 %v1325
        %1349 = vmatprep.subr.bf16.mxu0 0
        %1350 = vmatpush1.bf16.xpose.msra.mxu0 %v1328
        %1351 = vmatprep.subr.bf16.mxu0 0
        %1352 = vmatpush1.bf16.xpose.msra.mxu0 %v1331
        %1353 = vmatprep.subr.bf16.mxu0 0
        %1354 = vmatpush1.bf16.xpose.msra.mxu0 %v1334
        %1355 = vmatprep.subr.bf16.mxu0 0
        %1356 = vmatpush1.bf16.xpose.msra.mxu0 %v1337
        %1357 = vmatprep.subr.bf16.mxu0 0
        %1358 = vmatpush1.bf16.xpose.msra.mxu0 %v1340
        %1359 = vmatprep.subr.bf16.mxu0 0
        %1360 = vmatpush1.bf16.xpose.msra.mxu0 %v1343
        %1361 = vmatprep.subr.bf16.mxu0 0
        %1362 = vmatpush1.bf16.xpose.msra.mxu0 0
        %1363 = vmatprep.subr.bf16.mxu0 0
        %1364 = vmatpush1.bf16.xpose.msra.mxu0 0
        %1365 = vmatprep.subr.bf16.mxu0 0
        %1366 = vmatpush1.bf16.xpose.msra.mxu0 0
        %1367 = vmatprep.subr.bf16.mxu0 0
        %1368 = vmatpush1.bf16.xpose.msra.mxu0 0
        %1369 = vmatprep.subr.bf16.mxu0 0
        %1370 = vmatpush1.bf16.xpose.msra.mxu0 0
        %1371 = vmatprep.subr.bf16.mxu0 0
        %1372 = vmatpush1.bf16.xpose.msra.mxu0 0
        %1373 = vmatprep.subr.bf16.mxu0 0
        %1374 = vmatpush1.bf16.xpose.msra.mxu0 0
        %1375 = vmatprep.subr.bf16.mxu0 0
        %1376 = vmatpush1.bf16.xpose.msra.mxu0 0
        %1377 = vmatprep.mubr.bf16.mxu0 0
        %1378 = vmatmul.mubr.bf16.gmra.mrb[0].mxu0 %v1319
        %v1379 = vpop.f32.mrb[0].mxu0
        %v1380 = vadd.f32 0.0, %v1379
        %v1381 = vpop.f32.mrb[0].mxu0
        %v1382 = vpop.f32.mrb[0].mxu0
        %v1383 = vpop.f32.mrb[0].mxu0
        %1384 = vdwg.mxu0
        %v1401 = vunpack.c.l.b16 %v983
        %v1402 = vunpack.c.l.b16 %v984
        %v1403 = vunpack.c.l.b16 %v985
        %v1404 = vunpack.c.l.b16 %v986
        %v1405 = vunpack.c.l.b16 %v987
        %v1406 = vunpack.c.l.b16 %v988
        %v1407 = vunpack.c.l.b16 %v989
        %v1408 = vunpack.c.l.b16 %v990
        %v1409 = vunpack.c.l.b16 %v991
        %v1410 = vunpack.c.l.b16 %v992
        %v1411 = vunpack.c.l.b16 %v993
        %v1412 = vunpack.c.l.b16 %v994
        %v1413 = vunpack.c.l.b16 %v995
        %v1414 = vunpack.c.l.b16 %v996
        %v1415 = vunpack.c.l.b16 %v997
        %v1416 = vunpack.c.l.b16 %v998
        %v1417 = vpack.c.b16 %v1402, %v1401
        %v1418 = vpack.c.b16 %v1404, %v1403
        %v1419 = vpack.c.b16 %v1406, %v1405
        %v1420 = vpack.c.b16 %v1408, %v1407
        %v1421 = vpack.c.b16 %v1410, %v1409
        %v1422 = vpack.c.b16 %v1412, %v1411
        %v1423 = vpack.c.b16 %v1414, %v1413
        %v1424 = vpack.c.b16 %v1416, %v1415
        %v1426 = vsel %vm1103, %v934, 0
        %v1429 = vsel %vm1103, %v1417, 0
        %v1432 = vsel %vm1103, %v1418, 0
        %v1435 = vsel %vm1103, %v1419, 0
        %v1438 = vsel %vm1103, %v1420, 0
        %v1441 = vsel %vm1103, %v1421, 0
        %v1444 = vsel %vm1103, %v1422, 0
        %v1447 = vsel %vm1103, %v1423, 0
        %v1450 = vsel %vm1103, %v1424, 0
        %1452 = vmatprep.subr.bf16.mxu0 0
        %1453 = vmatpush1.bf16.xpose.msra.mxu0 %v1429
        %1454 = vmatprep.subr.bf16.mxu0 0
        %1455 = vmatpush1.bf16.xpose.msra.mxu0 %v1432
        %1456 = vmatprep.subr.bf16.mxu0 0
        %1457 = vmatpush1.bf16.xpose.msra.mxu0 %v1435
        %1458 = vmatprep.subr.bf16.mxu0 0
        %1459 = vmatpush1.bf16.xpose.msra.mxu0 %v1438
        %1460 = vmatprep.subr.bf16.mxu0 0
        %1461 = vmatpush1.bf16.xpose.msra.mxu0 %v1441
        %1462 = vmatprep.subr.bf16.mxu0 0
        %1463 = vmatpush1.bf16.xpose.msra.mxu0 %v1444
        %1464 = vmatprep.subr.bf16.mxu0 0
        %1465 = vmatpush1.bf16.xpose.msra.mxu0 %v1447
        %1466 = vmatprep.subr.bf16.mxu0 0
        %1467 = vmatpush1.bf16.xpose.msra.mxu0 %v1450
        %1468 = vmatprep.subr.bf16.mxu0 0
        %1469 = vmatpush1.bf16.xpose.msra.mxu0 0
        %1470 = vmatprep.subr.bf16.mxu0 0
        %1471 = vmatpush1.bf16.xpose.msra.mxu0 0
        %1472 = vmatprep.subr.bf16.mxu0 0
        %1473 = vmatpush1.bf16.xpose.msra.mxu0 0
        %1474 = vmatprep.subr.bf16.mxu0 0
        %1475 = vmatpush1.bf16.xpose.msra.mxu0 0
        %1476 = vmatprep.subr.bf16.mxu0 0
        %1477 = vmatpush1.bf16.xpose.msra.mxu0 0
        %1478 = vmatprep.subr.bf16.mxu0 0
        %1479 = vmatpush1.bf16.xpose.msra.mxu0 0
        %1480 = vmatprep.subr.bf16.mxu0 0
        %1481 = vmatpush1.bf16.xpose.msra.mxu0 0
        %1482 = vmatprep.subr.bf16.mxu0 0
        %1483 = vmatpush1.bf16.xpose.msra.mxu0 0
        %1484 = vmatprep.mubr.bf16.mxu0 0
        %1485 = vmatmul.mubr.bf16.gmra.mrb[0].mxu0 %v1426
        %v1486 = vpop.f32.mrb[0].mxu0
        %v1487 = vadd.f32 0.0, %v1486
        %v1488 = vpop.f32.mrb[0].mxu0
        %v1489 = vpop.f32.mrb[0].mxu0
        %v1490 = vpop.f32.mrb[0].mxu0
        %1491 = vdwg.mxu0
        %v1492 = vld [vmem:[#allocation2] sm:$0xff]
        %v1493 = vld [vmem:[#allocation2 + $0x8] sm:$0xff]
        %v1494 = vld [vmem:[#allocation2 + $0x10] sm:$0xff]
        %v1495 = vld [vmem:[#allocation2 + $0x18] sm:$0xff]
        %1496 = vmax.xlane.f32.xlu0 %v1166
        %v1497 = vpop.xlane.xlu0 %1496
        %1498 = vmax.xlane.f32.xlu0 %v1273
        %v1499 = vpop.xlane.xlu0 %1498
        %1500 = vmax.xlane.f32.xlu0 %v1380
        %v1501 = vpop.xlane.xlu0 %1500
        %1502 = vmax.xlane.f32.xlu0 %v1487
        %v1503 = vpop.xlane.xlu0 %1502
        %v1504 = vmax.f32 %v1492, %v1497
        %v1505 = vmax.f32 %v1493, %v1499
        %v1506 = vmax.f32 %v1494, %v1501
        %v1507 = vmax.f32 %v1495, %v1503
        %v1508 = vsub.f32 %v1492, %v1504
        %v1509 = vsub.f32 %v1493, %v1505
        %v1510 = vsub.f32 %v1494, %v1506
        %v1511 = vsub.f32 %v1495, %v1507
        %v1512 = vmul.f32 %v1508, 1.442695
        %v1513 = vpow.pop %v1512
        %v1514 = vmul.f32 %v1509, 1.442695
        %v1515 = vpow.pop %v1514
        %v1516 = vmul.f32 %v1510, 1.442695
        %v1517 = vpow.pop %v1516
        %v1518 = vmul.f32 %v1511, 1.442695
        %v1519 = vpow.pop %v1518
        %1521 = vset.pattern.permute.xlu0 0
        %1522 = vperm.xlu0 %1521, %v1504
        %v1523 = vpop.permute.xlu0 %1522
        %1526 = vset.pattern.permute.xlu0 0
        %1527 = vperm.xlu0 %1526, %v1505
        %v1528 = vpop.permute.xlu0 %1527
        %1531 = vset.pattern.permute.xlu0 0
        %1532 = vperm.xlu0 %1531, %v1506
        %v1533 = vpop.permute.xlu0 %1532
        %1536 = vset.pattern.permute.xlu0 0
        %1537 = vperm.xlu0 %1536, %v1507
        %v1538 = vpop.permute.xlu0 %1537
        %v1540 = vsub.f32 %v1166, %v1523
        %v1541 = vsub.f32 %v1273, %v1528
        %v1542 = vsub.f32 %v1380, %v1533
        %v1543 = vsub.f32 %v1487, %v1538
        %v1544 = vmul.f32 %v1540, 1.442695
        %v1545 = vpow.pop %v1544
        %v1546 = vmul.f32 %v1541, 1.442695
        %v1547 = vpow.pop %v1546
        %v1548 = vmul.f32 %v1542, 1.442695
        %v1549 = vpow.pop %v1548
        %v1550 = vmul.f32 %v1543, 1.442695
        %v1551 = vpow.pop %v1550
        %v1552 = vld [vmem:[#allocation3] sm:$0xff]
        %v1553 = vld [vmem:[#allocation3 + $0x8] sm:$0xff]
        %v1554 = vld [vmem:[#allocation3 + $0x10] sm:$0xff]
        %v1555 = vld [vmem:[#allocation3 + $0x18] sm:$0xff]
        %v1556 = vmul.f32 %v1513, %v1552
        %v1557 = vmul.f32 %v1515, %v1553
        %v1558 = vmul.f32 %v1517, %v1554
        %v1559 = vmul.f32 %v1519, %v1555
        %1560 = vadd.xlane.f32.xlu0 %v1545
        %v1561 = vpop.xlane.xlu0 %1560
        %1562 = vadd.xlane.f32.xlu0 %v1547
        %v1563 = vpop.xlane.xlu0 %1562
        %1564 = vadd.xlane.f32.xlu0 %v1549
        %v1565 = vpop.xlane.xlu0 %1564
        %1566 = vadd.xlane.f32.xlu0 %v1551
        %v1567 = vpop.xlane.xlu0 %1566
        %v1568 = vadd.f32 %v1556, %v1561
        %v1569 = vadd.f32 %v1557, %v1563
        %v1570 = vadd.f32 %v1558, %v1565
        %v1571 = vadd.f32 %v1559, %v1567
        %vm1572 = vcmask 7168
        %1573 = vst.msk [vmem:[#allocation3] sm:$0xff] %vm1572, %v1568
        %1574 = vst.msk [vmem:[#allocation3 + $0x8] sm:$0xff] %vm1572, %v1569
        %1575 = vst.msk [vmem:[#allocation3 + $0x10] sm:$0xff] %vm1572, %v1570
        %1576 = vst.msk [vmem:[#allocation3 + $0x18] sm:$0xff] %vm1572, %v1571
        %v1577 = vld [vmem:[#allocation4] sm:$0xff]
        %v1578 = vld [vmem:[#allocation4 + $0x8] sm:$0xff]
        %v1579 = vld [vmem:[#allocation4 + $0x10] sm:$0xff]
        %v1580 = vld [vmem:[#allocation4 + $0x18] sm:$0xff]
        %1582 = vset.pattern.permute.xlu0 0
        %1583 = vperm.xlu0 %1582, %v1513
        %v1584 = vpop.permute.xlu0 %1583
        %1587 = vset.pattern.permute.xlu0 0
        %1588 = vperm.xlu0 %1587, %v1515
        %v1589 = vpop.permute.xlu0 %1588
        %1592 = vset.pattern.permute.xlu0 0
        %1593 = vperm.xlu0 %1592, %v1517
        %v1594 = vpop.permute.xlu0 %1593
        %1597 = vset.pattern.permute.xlu0 0
        %1598 = vperm.xlu0 %1597, %v1519
        %v1599 = vpop.permute.xlu0 %1598
        %v1601 = vmul.f32 %v1584, %v1577
        %v1602 = vmul.f32 %v1589, %v1578
        %v1603 = vmul.f32 %v1594, %v1579
        %v1604 = vmul.f32 %v1599, %v1580
        %v1605 = vpack.c.bf16 %v1545, %v1545
        %v1606 = vpack.c.bf16 %v1547, %v1547
        %v1607 = vpack.c.bf16 %v1549, %v1549
        %v1608 = vpack.c.bf16 %v1551, %v1551
        %v1625 = vunpack.c.l.b16 %v999
        %v1626 = vunpack.c.l.b16 %v1000
        %v1627 = vunpack.c.l.b16 %v1001
        %v1628 = vunpack.c.l.b16 %v1002
        %v1629 = vunpack.c.l.b16 %v1003
        %v1630 = vunpack.c.l.b16 %v1004
        %v1631 = vunpack.c.l.b16 %v1005
        %v1632 = vunpack.c.l.b16 %v1006
        %v1633 = vunpack.c.l.b16 %v1007
        %v1634 = vunpack.c.l.b16 %v1008
        %v1635 = vunpack.c.l.b16 %v1009
        %v1636 = vunpack.c.l.b16 %v1010
        %v1637 = vunpack.c.l.b16 %v1011
        %v1638 = vunpack.c.l.b16 %v1012
        %v1639 = vunpack.c.l.b16 %v1013
        %v1640 = vunpack.c.l.b16 %v1014
        %v1641 = vpack.c.b16 %v1626, %v1625
        %v1642 = vpack.c.b16 %v1628, %v1627
        %v1643 = vpack.c.b16 %v1630, %v1629
        %v1644 = vpack.c.b16 %v1632, %v1631
        %v1645 = vpack.c.b16 %v1634, %v1633
        %v1646 = vpack.c.b16 %v1636, %v1635
        %v1647 = vpack.c.b16 %v1638, %v1637
        %v1648 = vpack.c.b16 %v1640, %v1639
        %1657 = vmatprep.subr.bf16.mxu0 0
        %1658 = vmatpush1.bf16.msra.mxu0 %v1641
        %1659 = vmatprep.subr.bf16.mxu0 0
        %1660 = vmatpush1.bf16.msra.mxu0 %v1642
        %1661 = vmatprep.subr.bf16.mxu0 0
        %1662 = vmatpush1.bf16.msra.mxu0 %v1643
        %1663 = vmatprep.subr.bf16.mxu0 0
        %1664 = vmatpush1.bf16.msra.mxu0 %v1644
        %1665 = vmatprep.subr.bf16.mxu0 0
        %1666 = vmatpush1.bf16.msra.mxu0 %v1645
        %1667 = vmatprep.subr.bf16.mxu0 0
        %1668 = vmatpush1.bf16.msra.mxu0 %v1646
        %1669 = vmatprep.subr.bf16.mxu0 0
        %1670 = vmatpush1.bf16.msra.mxu0 %v1647
        %1671 = vmatprep.subr.bf16.mxu0 0
        %1672 = vmatpush1.bf16.msra.mxu0 %v1648
        %1673 = vmatprep.subr.bf16.mxu0 0
        %1674 = vmatpush1.bf16.msra.mxu0 0
        %1675 = vmatprep.subr.bf16.mxu0 0
        %1676 = vmatpush1.bf16.msra.mxu0 0
        %1677 = vmatprep.subr.bf16.mxu0 0
        %1678 = vmatpush1.bf16.msra.mxu0 0
        %1679 = vmatprep.subr.bf16.mxu0 0
        %1680 = vmatpush1.bf16.msra.mxu0 0
        %1681 = vmatprep.subr.bf16.mxu0 0
        %1682 = vmatpush1.bf16.msra.mxu0 0
        %1683 = vmatprep.subr.bf16.mxu0 0
        %1684 = vmatpush1.bf16.msra.mxu0 0
        %1685 = vmatprep.subr.bf16.mxu0 0
        %1686 = vmatpush1.bf16.msra.mxu0 0
        %1687 = vmatprep.subr.bf16.mxu0 0
        %1688 = vmatpush1.bf16.msra.mxu0 0
        %1689 = vmatprep.mubr.bf16.mxu0 0
        %1690 = vmatmul.mubr.bf16.gmra.mrb[0].mxu0 %v1605
        %v1691 = vpop.f32.mrb[0].mxu0
        %v1692 = vadd.f32 0.0, %v1691
        %v1693 = vpop.f32.mrb[0].mxu0
        %v1694 = vpop.f32.mrb[0].mxu0
        %v1695 = vpop.f32.mrb[0].mxu0
        %1696 = vdwg.mxu0
        %v1713 = vunpack.c.l.b16 %v1015
        %v1714 = vunpack.c.l.b16 %v1016
        %v1715 = vunpack.c.l.b16 %v1017
        %v1716 = vunpack.c.l.b16 %v1018
        %v1717 = vunpack.c.l.b16 %v1019
        %v1718 = vunpack.c.l.b16 %v1020
        %v1719 = vunpack.c.l.b16 %v1021
        %v1720 = vunpack.c.l.b16 %v1022
        %v1721 = vunpack.c.l.b16 %v1023
        %v1722 = vunpack.c.l.b16 %v1024
        %v1723 = vunpack.c.l.b16 %v1025
        %v1724 = vunpack.c.l.b16 %v1026
        %v1725 = vunpack.c.l.b16 %v1027
        %v1726 = vunpack.c.l.b16 %v1028
        %v1727 = vunpack.c.l.b16 %v1029
        %v1728 = vunpack.c.l.b16 %v1030
        %v1729 = vpack.c.b16 %v1714, %v1713
        %v1730 = vpack.c.b16 %v1716, %v1715
        %v1731 = vpack.c.b16 %v1718, %v1717
        %v1732 = vpack.c.b16 %v1720, %v1719
        %v1733 = vpack.c.b16 %v1722, %v1721
        %v1734 = vpack.c.b16 %v1724, %v1723
        %v1735 = vpack.c.b16 %v1726, %v1725
        %v1736 = vpack.c.b16 %v1728, %v1727
        %1745 = vmatprep.subr.bf16.mxu0 0
        %1746 = vmatpush1.bf16.msra.mxu0 %v1729
        %1747 = vmatprep.subr.bf16.mxu0 0
        %1748 = vmatpush1.bf16.msra.mxu0 %v1730
        %1749 = vmatprep.subr.bf16.mxu0 0
        %1750 = vmatpush1.bf16.msra.mxu0 %v1731
        %1751 = vmatprep.subr.bf16.mxu0 0
        %1752 = vmatpush1.bf16.msra.mxu0 %v1732
        %1753 = vmatprep.subr.bf16.mxu0 0
        %1754 = vmatpush1.bf16.msra.mxu0 %v1733
        %1755 = vmatprep.subr.bf16.mxu0 0
        %1756 = vmatpush1.bf16.msra.mxu0 %v1734
        %1757 = vmatprep.subr.bf16.mxu0 0
        %1758 = vmatpush1.bf16.msra.mxu0 %v1735
        %1759 = vmatprep.subr.bf16.mxu0 0
        %1760 = vmatpush1.bf16.msra.mxu0 %v1736
        %1761 = vmatprep.subr.bf16.mxu0 0
        %1762 = vmatpush1.bf16.msra.mxu0 0
        %1763 = vmatprep.subr.bf16.mxu0 0
        %1764 = vmatpush1.bf16.msra.mxu0 0
        %1765 = vmatprep.subr.bf16.mxu0 0
        %1766 = vmatpush1.bf16.msra.mxu0 0
        %1767 = vmatprep.subr.bf16.mxu0 0
        %1768 = vmatpush1.bf16.msra.mxu0 0
        %1769 = vmatprep.subr.bf16.mxu0 0
        %1770 = vmatpush1.bf16.msra.mxu0 0
        %1771 = vmatprep.subr.bf16.mxu0 0
        %1772 = vmatpush1.bf16.msra.mxu0 0
        %1773 = vmatprep.subr.bf16.mxu0 0
        %1774 = vmatpush1.bf16.msra.mxu0 0
        %1775 = vmatprep.subr.bf16.mxu0 0
        %1776 = vmatpush1.bf16.msra.mxu0 0
        %1777 = vmatprep.mubr.bf16.mxu0 0
        %1778 = vmatmul.mubr.bf16.gmra.mrb[0].mxu0 %v1606
        %v1779 = vpop.f32.mrb[0].mxu0
        %v1780 = vadd.f32 0.0, %v1779
        %v1781 = vpop.f32.mrb[0].mxu0
        %v1782 = vpop.f32.mrb[0].mxu0
        %v1783 = vpop.f32.mrb[0].mxu0
        %1784 = vdwg.mxu0
        %v1801 = vunpack.c.l.b16 %v1031
        %v1802 = vunpack.c.l.b16 %v1032
        %v1803 = vunpack.c.l.b16 %v1033
        %v1804 = vunpack.c.l.b16 %v1034
        %v1805 = vunpack.c.l.b16 %v1035
        %v1806 = vunpack.c.l.b16 %v1036
        %v1807 = vunpack.c.l.b16 %v1037
        %v1808 = vunpack.c.l.b16 %v1038
        %v1809 = vunpack.c.l.b16 %v1039
        %v1810 = vunpack.c.l.b16 %v1040
        %v1811 = vunpack.c.l.b16 %v1041
        %v1812 = vunpack.c.l.b16 %v1042
        %v1813 = vunpack.c.l.b16 %v1043
        %v1814 = vunpack.c.l.b16 %v1044
        %v1815 = vunpack.c.l.b16 %v1045
        %v1816 = vunpack.c.l.b16 %v1046
        %v1817 = vpack.c.b16 %v1802, %v1801
        %v1818 = vpack.c.b16 %v1804, %v1803
        %v1819 = vpack.c.b16 %v1806, %v1805
        %v1820 = vpack.c.b16 %v1808, %v1807
        %v1821 = vpack.c.b16 %v1810, %v1809
        %v1822 = vpack.c.b16 %v1812, %v1811
        %v1823 = vpack.c.b16 %v1814, %v1813
        %v1824 = vpack.c.b16 %v1816, %v1815
        %1833 = vmatprep.subr.bf16.mxu0 0
        %1834 = vmatpush1.bf16.msra.mxu0 %v1817
        %1835 = vmatprep.subr.bf16.mxu0 0
        %1836 = vmatpush1.bf16.msra.mxu0 %v1818
        %1837 = vmatprep.subr.bf16.mxu0 0
        %1838 = vmatpush1.bf16.msra.mxu0 %v1819
        %1839 = vmatprep.subr.bf16.mxu0 0
        %1840 = vmatpush1.bf16.msra.mxu0 %v1820
        %1841 = vmatprep.subr.bf16.mxu0 0
        %1842 = vmatpush1.bf16.msra.mxu0 %v1821
        %1843 = vmatprep.subr.bf16.mxu0 0
        %1844 = vmatpush1.bf16.msra.mxu0 %v1822
        %1845 = vmatprep.subr.bf16.mxu0 0
        %1846 = vmatpush1.bf16.msra.mxu0 %v1823
        %1847 = vmatprep.subr.bf16.mxu0 0
        %1848 = vmatpush1.bf16.msra.mxu0 %v1824
        %1849 = vmatprep.subr.bf16.mxu0 0
        %1850 = vmatpush1.bf16.msra.mxu0 0
        %1851 = vmatprep.subr.bf16.mxu0 0
        %1852 = vmatpush1.bf16.msra.mxu0 0
        %1853 = vmatprep.subr.bf16.mxu0 0
        %1854 = vmatpush1.bf16.msra.mxu0 0
        %1855 = vmatprep.subr.bf16.mxu0 0
        %1856 = vmatpush1.bf16.msra.mxu0 0
        %1857 = vmatprep.subr.bf16.mxu0 0
        %1858 = vmatpush1.bf16.msra.mxu0 0
        %1859 = vmatprep.subr.bf16.mxu0 0
        %1860 = vmatpush1.bf16.msra.mxu0 0
        %1861 = vmatprep.subr.bf16.mxu0 0
        %1862 = vmatpush1.bf16.msra.mxu0 0
        %1863 = vmatprep.subr.bf16.mxu0 0
        %1864 = vmatpush1.bf16.msra.mxu0 0
        %1865 = vmatprep.mubr.bf16.mxu0 0
        %1866 = vmatmul.mubr.bf16.gmra.mrb[0].mxu0 %v1607
        %v1867 = vpop.f32.mrb[0].mxu0
        %v1868 = vadd.f32 0.0, %v1867
        %v1869 = vpop.f32.mrb[0].mxu0
        %v1870 = vpop.f32.mrb[0].mxu0
        %v1871 = vpop.f32.mrb[0].mxu0
        %1872 = vdwg.mxu0
        %v1889 = vunpack.c.l.b16 %v1047
        %v1890 = vunpack.c.l.b16 %v1048
        %v1891 = vunpack.c.l.b16 %v1049
        %v1892 = vunpack.c.l.b16 %v1050
        %v1893 = vunpack.c.l.b16 %v1051
        %v1894 = vunpack.c.l.b16 %v1052
        %v1895 = vunpack.c.l.b16 %v1053
        %v1896 = vunpack.c.l.b16 %v1054
        %v1897 = vunpack.c.l.b16 %v1055
        %v1898 = vunpack.c.l.b16 %v1056
        %v1899 = vunpack.c.l.b16 %v1057
        %v1900 = vunpack.c.l.b16 %v1058
        %v1901 = vunpack.c.l.b16 %v1059
        %v1902 = vunpack.c.l.b16 %v1060
        %v1903 = vunpack.c.l.b16 %v1061
        %v1904 = vunpack.c.l.b16 %v1062
        %v1905 = vpack.c.b16 %v1890, %v1889
        %v1906 = vpack.c.b16 %v1892, %v1891
        %v1907 = vpack.c.b16 %v1894, %v1893
        %v1908 = vpack.c.b16 %v1896, %v1895
        %v1909 = vpack.c.b16 %v1898, %v1897
        %v1910 = vpack.c.b16 %v1900, %v1899
        %v1911 = vpack.c.b16 %v1902, %v1901
        %v1912 = vpack.c.b16 %v1904, %v1903
        %1921 = vmatprep.subr.bf16.mxu0 0
        %1922 = vmatpush1.bf16.msra.mxu0 %v1905
        %1923 = vmatprep.subr.bf16.mxu0 0
        %1924 = vmatpush1.bf16.msra.mxu0 %v1906
        %1925 = vmatprep.subr.bf16.mxu0 0
        %1926 = vmatpush1.bf16.msra.mxu0 %v1907
        %1927 = vmatprep.subr.bf16.mxu0 0
        %1928 = vmatpush1.bf16.msra.mxu0 %v1908
        %1929 = vmatprep.subr.bf16.mxu0 0
        %1930 = vmatpush1.bf16.msra.mxu0 %v1909
        %1931 = vmatprep.subr.bf16.mxu0 0
        %1932 = vmatpush1.bf16.msra.mxu0 %v1910
        %1933 = vmatprep.subr.bf16.mxu0 0
        %1934 = vmatpush1.bf16.msra.mxu0 %v1911
        %1935 = vmatprep.subr.bf16.mxu0 0
        %1936 = vmatpush1.bf16.msra.mxu0 %v1912
        %1937 = vmatprep.subr.bf16.mxu0 0
        %1938 = vmatpush1.bf16.msra.mxu0 0
        %1939 = vmatprep.subr.bf16.mxu0 0
        %1940 = vmatpush1.bf16.msra.mxu0 0
        %1941 = vmatprep.subr.bf16.mxu0 0
        %1942 = vmatpush1.bf16.msra.mxu0 0
        %1943 = vmatprep.subr.bf16.mxu0 0
        %1944 = vmatpush1.bf16.msra.mxu0 0
        %1945 = vmatprep.subr.bf16.mxu0 0
        %1946 = vmatpush1.bf16.msra.mxu0 0
        %1947 = vmatprep.subr.bf16.mxu0 0
        %1948 = vmatpush1.bf16.msra.mxu0 0
        %1949 = vmatprep.subr.bf16.mxu0 0
        %1950 = vmatpush1.bf16.msra.mxu0 0
        %1951 = vmatprep.subr.bf16.mxu0 0
        %1952 = vmatpush1.bf16.msra.mxu0 0
        %1953 = vmatprep.mubr.bf16.mxu0 0
        %1954 = vmatmul.mubr.bf16.gmra.mrb[0].mxu0 %v1608
        %v1955 = vpop.f32.mrb[0].mxu0
        %v1956 = vadd.f32 0.0, %v1955
        %v1957 = vpop.f32.mrb[0].mxu0
        %v1958 = vpop.f32.mrb[0].mxu0
        %v1959 = vpop.f32.mrb[0].mxu0
        %1960 = vdwg.mxu0
        %v1961 = vadd.f32 %v1601, %v1692
        %v1962 = vadd.f32 %v1602, %v1780
        %v1963 = vadd.f32 %v1603, %v1868
        %v1964 = vadd.f32 %v1604, %v1956
        %1965 = vst.msk [vmem:[#allocation4] sm:$0xff] %vm1103, %v1961
        %1966 = vst.msk [vmem:[#allocation4 + $0x8] sm:$0xff] %vm1103, %v1962
        %1967 = vst.msk [vmem:[#allocation4 + $0x10] sm:$0xff] %vm1103, %v1963
        %1968 = vst.msk [vmem:[#allocation4 + $0x18] sm:$0xff] %vm1103, %v1964
        %1969 = vst.msk [vmem:[#allocation2] sm:$0xff] %vm1572, %v1504
        %1970 = vst.msk [vmem:[#allocation2 + $0x8] sm:$0xff] %vm1572, %v1505
        %1971 = vst.msk [vmem:[#allocation2 + $0x10] sm:$0xff] %vm1572, %v1506
        %1972 = vst.msk [vmem:[#allocation2 + $0x18] sm:$0xff] %vm1572, %v1507
        %p1973 = scmp.eq.s32.totalorder %s25, 1
        // Predicated region
        $region164: #{tpu_custom_call.1} parent=146 // pred_check
          %p1974 = pneg %p1973
        $region165: #{tpu_custom_call.1} parent=146 // pred_check_branch
          %1976 = sbr.rel (%p1974) target = $region167
        $region166: #{tpu_custom_call.1} parent=146 // pred_region
          %v1977 = vld [vmem:[#allocation3] sm:$0xff]
          %v1978 = vld [vmem:[#allocation3 + $0x8] sm:$0xff]
          %v1979 = vld [vmem:[#allocation3 + $0x10] sm:$0xff]
          %v1980 = vld [vmem:[#allocation3 + $0x18] sm:$0xff]
          %v1981 = vrcp.pop %v1977
          %v1982 = vrcp.pop %v1978
          %v1983 = vrcp.pop %v1979
          %v1984 = vrcp.pop %v1980
          %v1985 = vld [vmem:[#allocation4] sm:$0xff]
          %v1986 = vld [vmem:[#allocation4 + $0x8] sm:$0xff]
          %v1987 = vld [vmem:[#allocation4 + $0x10] sm:$0xff]
          %v1988 = vld [vmem:[#allocation4 + $0x18] sm:$0xff]
          %1990 = vset.pattern.permute.xlu0 0
          %1991 = vperm.xlu0 %1990, %v1981
          %v1992 = vpop.permute.xlu0 %1991
          %1995 = vset.pattern.permute.xlu0 0
          %1996 = vperm.xlu0 %1995, %v1982
          %v1997 = vpop.permute.xlu0 %1996
          %2000 = vset.pattern.permute.xlu0 0
          %2001 = vperm.xlu0 %2000, %v1983
          %v2002 = vpop.permute.xlu0 %2001
          %2005 = vset.pattern.permute.xlu0 0
          %2006 = vperm.xlu0 %2005, %v1984
          %v2007 = vpop.permute.xlu0 %2006
          %v2009 = vmul.f32 %v1985, %v1992
          %v2010 = vmul.f32 %v1986, %v1997
          %v2011 = vmul.f32 %v1987, %v2002
          %v2012 = vmul.f32 %v1988, %v2007
          %v2013 = vpack.c.bf16 %v2009, %v2009
          %v2014 = vpack.c.bf16 %v2010, %v2010
          %v2015 = vpack.c.bf16 %v2011, %v2011
          %v2016 = vpack.c.bf16 %v2012, %v2012
          %v2017 = vld [vmem:[%s3] sm:$0xf]
          %v2018 = vld [vmem:[%s3 + $0x4] sm:$0xf]
          %s2019 = scalar_lea.vmem %s3, 8
          %v2020 = vld [vmem:[%s2019] sm:$0xf]
          %v2021 = vld [vmem:[%s2019 + $0x4] sm:$0xf]
          %v2024 = vunpack.c.l.b16 %v2020
          %v2025 = vunpack.c.l.b16 %v2021
          %v2026 = vpack.c.b16 %v2025, %v2024
          %v2029 = vsel %vm1103, %v2014, 0
          %2031 = vmatprep.subr.bf16.mxu0 0
          %2032 = vmatpush1.bf16.msra.mxu0 %v2026
          %2033 = vmatprep.subr.bf16.mxu0 0
          %2034 = vmatpush1.bf16.msra.mxu0 0
          %2035 = vmatprep.subr.bf16.mxu0 0
          %2036 = vmatpush1.bf16.msra.mxu0 0
          %2037 = vmatprep.subr.bf16.mxu0 0
          %2038 = vmatpush1.bf16.msra.mxu0 0
          %2039 = vmatprep.subr.bf16.mxu0 0
          %2040 = vmatpush1.bf16.msra.mxu0 0
          %2041 = vmatprep.subr.bf16.mxu0 0
          %2042 = vmatpush1.bf16.msra.mxu0 0
          %2043 = vmatprep.subr.bf16.mxu0 0
          %2044 = vmatpush1.bf16.msra.mxu0 0
          %2045 = vmatprep.subr.bf16.mxu0 0
          %2046 = vmatpush1.bf16.msra.mxu0 0
          %2047 = vmatprep.subr.bf16.mxu0 0
          %2048 = vmatpush1.bf16.msra.mxu0 0
          %2049 = vmatprep.subr.bf16.mxu0 0
          %2050 = vmatpush1.bf16.msra.mxu0 0
          %2051 = vmatprep.subr.bf16.mxu0 0
          %2052 = vmatpush1.bf16.msra.mxu0 0
          %2053 = vmatprep.subr.bf16.mxu0 0
          %2054 = vmatpush1.bf16.msra.mxu0 0
          %2055 = vmatprep.subr.bf16.mxu0 0
          %2056 = vmatpush1.bf16.msra.mxu0 0
          %2057 = vmatprep.subr.bf16.mxu0 0
          %2058 = vmatpush1.bf16.msra.mxu0 0
          %2059 = vmatprep.subr.bf16.mxu0 0
          %2060 = vmatpush1.bf16.msra.mxu0 0
          %2061 = vmatprep.subr.bf16.mxu0 0
          %2062 = vmatpush1.bf16.msra.mxu0 0
          %2063 = vmatprep.mubr.bf16.mxu0 0
          %2064 = vmatmul.mubr.bf16.gmra.mrb[0].mxu0 %v2029
          %v2065 = vpop.f32.mrb[0].mxu0
          %v2066 = vadd.f32 0.0, %v2065
          %v2067 = vpop.f32.mrb[0].mxu0
          %v2068 = vpop.f32.mrb[0].mxu0
          %v2069 = vpop.f32.mrb[0].mxu0
          %2070 = vdwg.mxu0
          %v2073 = vunpack.c.l.b16 %v2017
          %v2074 = vunpack.c.l.b16 %v2018
          %v2075 = vpack.c.b16 %v2074, %v2073
          %v2078 = vsel %vm1103, %v2013, 0
          %2080 = vmatprep.subr.bf16.mxu0 0
          %2081 = vmatpush1.bf16.msra.mxu0 %v2075
          %2082 = vmatprep.subr.bf16.mxu0 0
          %2083 = vmatpush1.bf16.msra.mxu0 0
          %2084 = vmatprep.subr.bf16.mxu0 0
          %2085 = vmatpush1.bf16.msra.mxu0 0
          %2086 = vmatprep.subr.bf16.mxu0 0
          %2087 = vmatpush1.bf16.msra.mxu0 0
          %2088 = vmatprep.subr.bf16.mxu0 0
          %2089 = vmatpush1.bf16.msra.mxu0 0
          %2090 = vmatprep.subr.bf16.mxu0 0
          %2091 = vmatpush1.bf16.msra.mxu0 0
          %2092 = vmatprep.subr.bf16.mxu0 0
          %2093 = vmatpush1.bf16.msra.mxu0 0
          %2094 = vmatprep.subr.bf16.mxu0 0
          %2095 = vmatpush1.bf16.msra.mxu0 0
          %2096 = vmatprep.subr.bf16.mxu0 0
          %2097 = vmatpush1.bf16.msra.mxu0 0
          %2098 = vmatprep.subr.bf16.mxu0 0
          %2099 = vmatpush1.bf16.msra.mxu0 0
          %2100 = vmatprep.subr.bf16.mxu0 0
          %2101 = vmatpush1.bf16.msra.mxu0 0
          %2102 = vmatprep.subr.bf16.mxu0 0
          %2103 = vmatpush1.bf16.msra.mxu0 0
          %2104 = vmatprep.subr.bf16.mxu0 0
          %2105 = vmatpush1.bf16.msra.mxu0 0
          %2106 = vmatprep.subr.bf16.mxu0 0
          %2107 = vmatpush1.bf16.msra.mxu0 0
          %2108 = vmatprep.subr.bf16.mxu0 0
          %2109 = vmatpush1.bf16.msra.mxu0 0
          %2110 = vmatprep.subr.bf16.mxu0 0
          %2111 = vmatpush1.bf16.msra.mxu0 0
          %2112 = vmatprep.mubr.bf16.mxu0 0
          %2113 = vmatmul.mubr.bf16.gmra.mrb[0].mxu0 %v2078
          %v2114 = vpop.f32.mrb[0].mxu0
          %v2115 = vadd.f32 %v2066, %v2114
          %v2116 = vpop.f32.mrb[0].mxu0
          %v2117 = vpop.f32.mrb[0].mxu0
          %v2118 = vpop.f32.mrb[0].mxu0
          %2119 = vdwg.mxu0
          %s2120 = scalar_lea.vmem %s3, 16
          %v2121 = vld [vmem:[%s2120] sm:$0xf]
          %v2122 = vld [vmem:[%s2120 + $0x4] sm:$0xf]
          %v2125 = vunpack.c.l.b16 %v2121
          %v2126 = vunpack.c.l.b16 %v2122
          %v2127 = vpack.c.b16 %v2126, %v2125
          %v2130 = vsel %vm1103, %v2015, 0
          %2132 = vmatprep.subr.bf16.mxu0 0
          %2133 = vmatpush1.bf16.msra.mxu0 %v2127
          %2134 = vmatprep.subr.bf16.mxu0 0
          %2135 = vmatpush1.bf16.msra.mxu0 0
          %2136 = vmatprep.subr.bf16.mxu0 0
          %2137 = vmatpush1.bf16.msra.mxu0 0
          %2138 = vmatprep.subr.bf16.mxu0 0
          %2139 = vmatpush1.bf16.msra.mxu0 0
          %2140 = vmatprep.subr.bf16.mxu0 0
          %2141 = vmatpush1.bf16.msra.mxu0 0
          %2142 = vmatprep.subr.bf16.mxu0 0
          %2143 = vmatpush1.bf16.msra.mxu0 0
          %2144 = vmatprep.subr.bf16.mxu0 0
          %2145 = vmatpush1.bf16.msra.mxu0 0
          %2146 = vmatprep.subr.bf16.mxu0 0
          %2147 = vmatpush1.bf16.msra.mxu0 0
          %2148 = vmatprep.subr.bf16.mxu0 0
          %2149 = vmatpush1.bf16.msra.mxu0 0
          %2150 = vmatprep.subr.bf16.mxu0 0
          %2151 = vmatpush1.bf16.msra.mxu0 0
          %2152 = vmatprep.subr.bf16.mxu0 0
          %2153 = vmatpush1.bf16.msra.mxu0 0
          %2154 = vmatprep.subr.bf16.mxu0 0
          %2155 = vmatpush1.bf16.msra.mxu0 0
          %2156 = vmatprep.subr.bf16.mxu0 0
          %2157 = vmatpush1.bf16.msra.mxu0 0
          %2158 = vmatprep.subr.bf16.mxu0 0
          %2159 = vmatpush1.bf16.msra.mxu0 0
          %2160 = vmatprep.subr.bf16.mxu0 0
          %2161 = vmatpush1.bf16.msra.mxu0 0
          %2162 = vmatprep.subr.bf16.mxu0 0
          %2163 = vmatpush1.bf16.msra.mxu0 0
          %2164 = vmatprep.mubr.bf16.mxu0 0
          %2165 = vmatmul.mubr.bf16.gmra.mrb[0].mxu0 %v2130
          %v2166 = vpop.f32.mrb[0].mxu0
          %v2167 = vadd.f32 0.0, %v2166
          %v2168 = vpop.f32.mrb[0].mxu0
          %v2169 = vpop.f32.mrb[0].mxu0
          %v2170 = vpop.f32.mrb[0].mxu0
          %2171 = vdwg.mxu0
          %v2172 = vadd.f32 %v2115, %v2167
          %s2173 = scalar_lea.vmem %s3, 24
          %v2174 = vld [vmem:[%s2173] sm:$0xf]
          %v2175 = vld [vmem:[%s2173 + $0x4] sm:$0xf]
          %v2178 = vunpack.c.l.b16 %v2174
          %v2179 = vunpack.c.l.b16 %v2175
          %v2180 = vpack.c.b16 %v2179, %v2178
          %v2183 = vsel %vm1103, %v2016, 0
          %2185 = vmatprep.subr.bf16.mxu0 0
          %2186 = vmatpush1.bf16.msra.mxu0 %v2180
          %2187 = vmatprep.subr.bf16.mxu0 0
          %2188 = vmatpush1.bf16.msra.mxu0 0
          %2189 = vmatprep.subr.bf16.mxu0 0
          %2190 = vmatpush1.bf16.msra.mxu0 0
          %2191 = vmatprep.subr.bf16.mxu0 0
          %2192 = vmatpush1.bf16.msra.mxu0 0
          %2193 = vmatprep.subr.bf16.mxu0 0
          %2194 = vmatpush1.bf16.msra.mxu0 0
          %2195 = vmatprep.subr.bf16.mxu0 0
          %2196 = vmatpush1.bf16.msra.mxu0 0
          %2197 = vmatprep.subr.bf16.mxu0 0
          %2198 = vmatpush1.bf16.msra.mxu0 0
          %2199 = vmatprep.subr.bf16.mxu0 0
          %2200 = vmatpush1.bf16.msra.mxu0 0
          %2201 = vmatprep.subr.bf16.mxu0 0
          %2202 = vmatpush1.bf16.msra.mxu0 0
          %2203 = vmatprep.subr.bf16.mxu0 0
          %2204 = vmatpush1.bf16.msra.mxu0 0
          %2205 = vmatprep.subr.bf16.mxu0 0
          %2206 = vmatpush1.bf16.msra.mxu0 0
          %2207 = vmatprep.subr.bf16.mxu0 0
          %2208 = vmatpush1.bf16.msra.mxu0 0
          %2209 = vmatprep.subr.bf16.mxu0 0
          %2210 = vmatpush1.bf16.msra.mxu0 0
          %2211 = vmatprep.subr.bf16.mxu0 0
          %2212 = vmatpush1.bf16.msra.mxu0 0
          %2213 = vmatprep.subr.bf16.mxu0 0
          %2214 = vmatpush1.bf16.msra.mxu0 0
          %2215 = vmatprep.subr.bf16.mxu0 0
          %2216 = vmatpush1.bf16.msra.mxu0 0
          %2217 = vmatprep.mubr.bf16.mxu0 0
          %2218 = vmatmul.mubr.bf16.gmra.mrb[0].mxu0 %v2183
          %v2219 = vpop.f32.mrb[0].mxu0
          %v2220 = vadd.f32 0.0, %v2219
          %v2221 = vpop.f32.mrb[0].mxu0
          %v2222 = vpop.f32.mrb[0].mxu0
          %v2223 = vpop.f32.mrb[0].mxu0
          %2224 = vdwg.mxu0
          %v2225 = vadd.f32 %v2172, %v2220
          %vm2226 = vcmask 261120
          %2227 = vst.msk [vmem:[%s909] sm:$0xff] %vm2226, %v2225
        $region167: #{tpu_custom_call.1} parent=146 // pred_fallthru
          _
        %s2228 = sand.u32 %s152, 1
        %s2229 = scalar_lea.sflag [#allocation9], %s2228
        %s2230 = sand.u32 %s152, 1
        %s2231 = smul.addr %s2230, 8
        %s2232 = scalar_lea.vmem [#allocation8], %s2231
        // Predicated region
        $region168: #{tpu_custom_call.1} parent=146 // pred_check
          %p2233 = pneg %p162
        $region169: #{tpu_custom_call.1} parent=146 // pred_check_branch
          %2235 = sbr.rel (%p2233) target = $region171
        $region170: #{tpu_custom_call.1} parent=146 // pred_region
          %s2237 = ssub.s32 128, 128
          %2238 = vsyncadd %s2229, %s2237
          %s2239 = smul.addr %s23, 2
          %s2240 = sadd.s32 %s24, %s2239
          %s2241 = smul.addr %s2240, 128
          %s2242 = scalar_lea.hbm %s4, %s2241
          %s2244 = sshll.u32 %s2232, 4
          %s2245 = int_to_ptr.vmem [resolvable:$true] %s2244
          %2247 = dma.vmem_to_hbm [thread:$0]  %s2245, 128, %s2242, %s2229
        $region171: #{tpu_custom_call.1} parent=146 // pred_fallthru
          _
      $region147: #{tpu_custom_call.1} parent=5 // pred_fallthru
        _
      %p2248 = scmp.le.s32.totalorder 2, %s13
      // Predicated region
      $region172: #{tpu_custom_call.1} parent=5 // pred_check
        %p2249 = pneg %p2248
      $region173: #{tpu_custom_call.1} parent=5 // pred_check_branch
        %2251 = sbr.rel (%p2249) target = $region175
      $region174: #{tpu_custom_call.1} parent=5 // pred_region
        %s2252 = ssub.s32 %s13, 2
        // Predicated region
        $region176: #{tpu_custom_call.1} parent=174 // pred_check
          %p2253 = pneg %p168
        $region177: #{tpu_custom_call.1} parent=174 // pred_check_branch
          %2255 = sbr.rel (%p2253) target = $region179
        $region178: #{tpu_custom_call.1} parent=174 // pred_region
          %s2256 = sand.u32 %s153, 1
          %s2257 = scalar_lea.sflag [#allocation9], %s2256
          %s2258 = sand.u32 %s153, 1
          %s2259 = smul.addr %s2258, 8
          %s2260 = scalar_lea.vmem [#allocation8], %s2259
          %2261 = dma.done %s2257, 128
        $region179: #{tpu_custom_call.1} parent=174 // pred_fallthru
          _
      $region175: #{tpu_custom_call.1} parent=5 // pred_fallthru
        _
    $region6: #{tpu_custom_call.1} parent=1 // loop_footer
      %s17 = sadd.s32 1, %s13
    $region7: #{tpu_custom_call.1} parent=1 // loop_footer_branch
      %12 = sbr.rel target = $region3
    $region8: #{tpu_custom_call.1} parent=1 // loop_exit
      _
    %2262 = vsyncpa [#allocation9], 1
    %s2263 = scalar_lea.sflag [#allocation9], 1
    %2264 = vsyncpa %s2263, 1

</llo_original>
